<compile_context>
chip_gen: v7x
topology: tpu7x:2x2x1
jax: 0.10.0
libtpu: 0.0.40
codegen_flags: <defaults>
</compile_context>

<pallas_src>
from functools import partial

import jax
import jax.numpy as jnp
from jax.experimental import pallas as pl
from jax.experimental.pallas import tpu as pltpu


def mlp_kernel(x_ref, w1_ref, b1_ref, w2_ref, b2_ref, o_ref):
    # First linear layer: (TB, Din_p) @ (Din_p, H_p) -> f32 accumulate, + bias.
    h = jnp.dot(x_ref[...], w1_ref[...], preferred_element_type=jnp.float32)
    # Dropout (eval mode) -> identity, then ReLU.
    h = jnp.maximum(h + b1_ref[...], 0.0)
    # Second linear layer: (TB, H_p) @ (H_p, Dout_p) -> f32 accumulate, + bias.
    out = jnp.dot(h.astype(jnp.bfloat16), w2_ref[...],
                  preferred_element_type=jnp.float32)
    o_ref[...] = (out + b2_ref[...]).astype(o_ref.dtype)


def _round_up(x, m):
    return (x + m - 1) // m * m


def _cdiv(a, b):
    return (a + b - 1) // b


def prepare_mlp_params(w1, b1, w2, b2):
    """One-time pad/cast of nn.Linear params (weights already in (in, out) layout).

    Returns ((w1p, b1p, w2p, b2p), dim_out): bf16 weights and f32 biases padded to
    lane-dense multiples of 128, ready to be fed straight into the kernel."""
    dim_in, dim_hidden = w1.shape
    dim_out = w2.shape[1]
    din_p, dh_p, do_p = (_round_up(d, 128) for d in (dim_in, dim_hidden, dim_out))
    w1p = jnp.pad(w1.astype(jnp.bfloat16),
                  ((0, din_p - dim_in), (0, dh_p - dim_hidden)))
    b1p = jnp.pad(b1.astype(jnp.float32), (0, dh_p - dim_hidden)).reshape(1, dh_p)
    w2p = jnp.pad(w2.astype(jnp.bfloat16),
                  ((0, dh_p - dim_hidden), (0, do_p - dim_out)))
    b2p = jnp.pad(b2.astype(jnp.float32), (0, do_p - dim_out)).reshape(1, do_p)
    return (w1p, b1p, w2p, b2p), dim_out


@partial(jax.jit,
         static_argnames=("dim_out", "batch_tile", "min_tiles",
                          "single_buffer_weights"))
def mlp_forward(x, w1p, b1p, w2p, b2p, *, dim_out, batch_tile=512, min_tiles=2,
                single_buffer_weights=True):
    """x: (B, C, H, W). w1p/b1p/w2p/b2p: pre-padded params from prepare_mlp_params.
    Zero padding is numerically exact (zero weight rows/cols and zero bias entries
    contribute nothing, ReLU(0) = 0); padded rows/lanes are sliced off at the end."""
    B = x.shape[0]
    dim_in = x.shape[1] * x.shape[-2] * x.shape[-1]
    din_p, dh_p = w1p.shape
    do_p = w2p.shape[1]
    assert din_p == _round_up(dim_in, 128), "w1p not padded for this input size"

    # Balanced, sublane-aligned batch tiling. min_tiles=2 keeps both v7x
    # TensorCores busy (harmless extra ~0.35us grid step on v5e/v6e); tiny
    # batches (B < 32) collapse to a single tile to avoid pure padding waste.
    n_target = max(_cdiv(B, batch_tile), min(min_tiles, _cdiv(B, 16)))
    tb = _round_up(_cdiv(B, n_target), 16)
    bp = _round_up(B, tb)
    n_tiles = bp // tb

    # Flatten exactly like x.view(-1, C*H*W); cast+pad is fused by XLA into a
    # single pass and (with allow_input_fusion) into the pallas_call input DMA.
    xp = jnp.pad(x.reshape(-1, dim_in).astype(jnp.bfloat16),
                 ((0, bp - B), (0, din_p - dim_in)))

    # Resident operands (constant index_map): single-buffer them — double
    # buffering a block that never changes only doubles its VMEM footprint.
    resident_kwargs = (
        dict(pipeline_mode=pl.Buffered(1)) if single_buffer_weights else {})

    flops = 2 * bp * (din_p * dh_p + dh_p * do_p)
    bytes_accessed = (xp.size * 2 + w1p.size * 2 + w2p.size * 2
                      + b1p.size * 4 + b2p.size * 4 + bp * do_p * 4)

    out = pl.pallas_call(
        mlp_kernel,
        out_shape=jax.ShapeDtypeStruct((bp, do_p), jnp.float32),
        grid_spec=pltpu.PrefetchScalarGridSpec(
            num_scalar_prefetch=0,
            grid=(n_tiles,),
            in_specs=[
                # x: tiled over batch (double-buffered by default).
                pl.BlockSpec((tb, din_p), lambda i: (i, 0)),
                # Weights / biases: resident across the whole grid.
                pl.BlockSpec((din_p, dh_p), lambda i: (0, 0), **resident_kwargs),
                pl.BlockSpec((1, dh_p), lambda i: (0, 0), **resident_kwargs),
                pl.BlockSpec((dh_p, do_p), lambda i: (0, 0), **resident_kwargs),
                pl.BlockSpec((1, do_p), lambda i: (0, 0), **resident_kwargs),
            ],
            out_specs=pl.BlockSpec((tb, do_p), lambda i: (i, 0)),
        ),
        compiler_params=pltpu.CompilerParams(
            dimension_semantics=("parallel",),
            allow_input_fusion=[0],  # fuse x's reshape/cast/pad into the call
        ),
        cost_estimate=pl.CostEstimate(
            flops=flops, transcendentals=0, bytes_accessed=bytes_accessed),
    )(xp, w1p, b1p, w2p, b2p)

    # TODO(synk): if dim_in*dim_hidden ever grows past ~20 MiB bf16 (v7x VMEM),
    # add a hidden-dim "arbitrary" grid axis with an f32 accumulator scratch
    # instead of keeping w1 fully resident.

    # Slice padded rows/lanes back off.
    return out[:B, :dim_out].astype(x.dtype)


def init_linear_params(key, fan_in, fan_out, dtype=jnp.float32):
    """Deterministic init mimicking nn.Linear defaults (uniform +/- 1/sqrt(fan_in)).
    Returned weight is already transposed to (fan_in, fan_out)."""
    kw, kb = jax.random.split(key)
    bound = 1.0 / jnp.sqrt(jnp.float32(fan_in))
    w = jax.random.uniform(kw, (fan_in, fan_out), dtype, -bound, bound)
    b = jax.random.uniform(kb, (fan_out,), dtype, -bound, bound)
    return w, b


if __name__ == "__main__":
    key = jax.random.PRNGKey(0)
    k_x, k_l1, k_l2 = jax.random.split(key, 3)

    # Small shapes consistent with the module's forward:
    B, C, H, W = 2, 4, 16, 16
    dim_in = C * H * W          # 1024
    dim_hidden = 32
    dim_out = 10

    x = jax.random.normal(k_x, (B, C, H, W), jnp.float32)
    w1, b1 = init_linear_params(k_l1, dim_in, dim_hidden)
    w2, b2 = init_linear_params(k_l2, dim_hidden, dim_out)

    # One-time weight preparation (hoisted out of the per-call forward path).
    padded_params, dout = prepare_mlp_params(w1, b1, w2, b2)

    try:
        out = jax.block_until_ready(
            mlp_forward(x, *padded_params, dim_out=dout))
    except Exception:
        # Fallback for JAX versions without BlockSpec pipeline_mode support.
        out = jax.block_until_ready(
            mlp_forward(x, *padded_params, dim_out=dout,
                        single_buffer_weights=False))

    assert out.shape == (B, dim_out)

    # Reference with the same bf16-operand / f32-accumulate recipe (dropout = identity).
    x2d = x.reshape(-1, dim_in)
    h_ref = jnp.maximum(
        jnp.dot(x2d.astype(jnp.bfloat16), w1.astype(jnp.bfloat16),
                preferred_element_type=jnp.float32) + b1, 0.0)
    ref_bf16 = jnp.dot(h_ref.astype(jnp.bfloat16), w2.astype(jnp.bfloat16),
                       preferred_element_type=jnp.float32) + b2
    assert jnp.allclose(out, ref_bf16, atol=2e-3, rtol=2e-3)

    # Loose check against the full-f32 reference (bf16 operand rounding only).
    ref_f32 = jnp.maximum(x2d @ w1 + b1, 0.0) @ w2 + b2
    assert jnp.allclose(out, ref_f32, atol=5e-2, rtol=5e-2)

    print("KERNEL_OK")
</pallas_src>

<mosaic_0001>
module attributes {stable_mosaic.version = 11 : i64} {
  func.func @mlp_kernel(%arg0: i32, %arg1: memref<16x1024xbf16, #tpu.memory_space<vmem>>, %arg2: memref<1024x128xbf16, #tpu.memory_space<vmem>>, %arg3: memref<1x128xf32, #tpu.memory_space<vmem>>, %arg4: memref<128x128xbf16, #tpu.memory_space<vmem>>, %arg5: memref<1x128xf32, #tpu.memory_space<vmem>>, %arg6: memref<16x128xf32, #tpu.memory_space<vmem>>) attributes {dimension_semantics = [#tpu.dimension_semantics<parallel>], iteration_bounds = array<i64: 1>, scalar_prefetch = 0 : i64, scratch_operands = 0 : i64, tpu.core_type = #tpu.core_type<tc>, window_params = [{transform_indices = @transform_0, window_bounds = array<i64: 16, 1024>}, {pipeline_mode = #tpu.pipeline_mode<synchronous>, transform_indices = @transform_1, window_bounds = array<i64: 1024, 128>}, {pipeline_mode = #tpu.pipeline_mode<synchronous>, transform_indices = @transform_2, window_bounds = array<i64: 1, 128>}, {pipeline_mode = #tpu.pipeline_mode<synchronous>, transform_indices = @transform_3, window_bounds = array<i64: 128, 128>}, {pipeline_mode = #tpu.pipeline_mode<synchronous>, transform_indices = @transform_4, window_bounds = array<i64: 1, 128>}, {transform_indices = @transform_5, window_bounds = array<i64: 16, 128>}]} {
    %c0 = arith.constant 0 : index
    %c0_0 = arith.constant 0 : index
    %0 = vector.load %arg1[%c0, %c0_0] : memref<16x1024xbf16, #tpu.memory_space<vmem>>, vector<16x1024xbf16>
    %c0_1 = arith.constant 0 : index
    %c0_2 = arith.constant 0 : index
    %1 = vector.load %arg2[%c0_1, %c0_2] : memref<1024x128xbf16, #tpu.memory_space<vmem>>, vector<1024x128xbf16>
    %cst = arith.constant dense<0.000000e+00> : vector<16x128xf32>
    %2 = tpu.matmul %0, %1, %cst {dimension_numbers = #tpu.dot_dimension_numbers<[1], [0], [0], [1], [0, 0, 1, 1], [], []>} : vector<16x1024xbf16>, vector<1024x128xbf16>, vector<16x128xf32> -> vector<16x128xf32>
    %c0_3 = arith.constant 0 : index
    %c0_4 = arith.constant 0 : index
    %3 = vector.load %arg3[%c0_3, %c0_4] : memref<1x128xf32, #tpu.memory_space<vmem>>, vector<1x128xf32>
    %4 = vector.broadcast %3 : vector<1x128xf32> to vector<16x128xf32>
    %5 = arith.addf %2, %4 : vector<16x128xf32>
    %cst_5 = arith.constant 0.000000e+00 : f32
    %6 = vector.broadcast %cst_5 : f32 to vector<16x128xf32>
    %7 = arith.maximumf %5, %6 : vector<16x128xf32>
    %8 = arith.truncf %7 : vector<16x128xf32> to vector<16x128xbf16>
    %c0_6 = arith.constant 0 : index
    %c0_7 = arith.constant 0 : index
    %9 = vector.load %arg4[%c0_6, %c0_7] : memref<128x128xbf16, #tpu.memory_space<vmem>>, vector<128x128xbf16>
    %cst_8 = arith.constant dense<0.000000e+00> : vector<16x128xf32>
    %10 = tpu.matmul %8, %9, %cst_8 {dimension_numbers = #tpu.dot_dimension_numbers<[1], [0], [0], [1], [0, 0, 1, 1], [], []>} : vector<16x128xbf16>, vector<128x128xbf16>, vector<16x128xf32> -> vector<16x128xf32>
    %c0_9 = arith.constant 0 : index
    %c0_10 = arith.constant 0 : index
    %11 = vector.load %arg5[%c0_9, %c0_10] : memref<1x128xf32, #tpu.memory_space<vmem>>, vector<1x128xf32>
    %12 = vector.broadcast %11 : vector<1x128xf32> to vector<16x128xf32>
    %13 = arith.addf %10, %12 : vector<16x128xf32>
    %c0_11 = arith.constant 0 : index
    %c0_12 = arith.constant 0 : index
    %14 = vector.load %arg6[%c0_11, %c0_12] : memref<16x128xf32, #tpu.memory_space<vmem>>, vector<16x128xf32>
    tpu.vector_store %arg6[%c0_11, %c0_12], %13 {strides = array<i32>} : memref<16x128xf32, #tpu.memory_space<vmem>>, vector<16x128xf32>,
    return
  }
  func.func @transform_0(%arg0: i32) -> (i32, i32) {
    %c0_i32 = arith.constant 0 : i32
    %c0_i32_0 = arith.constant 0 : i32
    return %arg0, %c0_i32 : i32, i32
  }
  func.func @transform_1(%arg0: i32) -> (i32, i32) {
    %c0_i32 = arith.constant 0 : i32
    %c0_i32_0 = arith.constant 0 : i32
    %c0_i32_1 = arith.constant 0 : i32
    return %c0_i32, %c0_i32_0 : i32, i32
  }
  func.func @transform_2(%arg0: i32) -> (i32, i32) {
    %c0_i32 = arith.constant 0 : i32
    %c0_i32_0 = arith.constant 0 : i32
    %c0_i32_1 = arith.constant 0 : i32
    return %c0_i32, %c0_i32_0 : i32, i32
  }
  func.func @transform_3(%arg0: i32) -> (i32, i32) {
    %c0_i32 = arith.constant 0 : i32
    %c0_i32_0 = arith.constant 0 : i32
    %c0_i32_1 = arith.constant 0 : i32
    return %c0_i32, %c0_i32_0 : i32, i32
  }
  func.func @transform_4(%arg0: i32) -> (i32, i32) {
    %c0_i32 = arith.constant 0 : i32
    %c0_i32_0 = arith.constant 0 : i32
    %c0_i32_1 = arith.constant 0 : i32
    return %c0_i32, %c0_i32_0 : i32, i32
  }
  func.func @transform_5(%arg0: i32) -> (i32, i32) {
    %c0_i32 = arith.constant 0 : i32
    %c0_i32_0 = arith.constant 0 : i32
    return %arg0, %c0_i32 : i32, i32
  }
}

module attributes {stable_mosaic.version = 11 : i64} {
  func.func @mlp_kernel(%arg0: i32, %arg1: memref<16x1024xbf16, #tpu.memory_space<vmem>>, %arg2: memref<1024x128xbf16, #tpu.memory_space<vmem>>, %arg3: memref<1x128xf32, #tpu.memory_space<vmem>>, %arg4: memref<128x128xbf16, #tpu.memory_space<vmem>>, %arg5: memref<1x128xf32, #tpu.memory_space<vmem>>, %arg6: memref<16x128xf32, #tpu.memory_space<vmem>>) attributes {dimension_semantics = [#tpu.dimension_semantics<parallel>], iteration_bounds = array<i64: 1>, scalar_prefetch = 0 : i64, scratch_operands = 0 : i64, tpu.core_type = #tpu.core_type<tc>, window_params = [{transform_indices = @transform_0, window_bounds = array<i64: 16, 1024>}, {pipeline_mode = #tpu.pipeline_mode<synchronous>, transform_indices = @transform_1, window_bounds = array<i64: 1024, 128>}, {pipeline_mode = #tpu.pipeline_mode<synchronous>, transform_indices = @transform_2, window_bounds = array<i64: 1, 128>}, {pipeline_mode = #tpu.pipeline_mode<synchronous>, transform_indices = @transform_3, window_bounds = array<i64: 128, 128>}, {pipeline_mode = #tpu.pipeline_mode<synchronous>, transform_indices = @transform_4, window_bounds = array<i64: 1, 128>}, {transform_indices = @transform_5, window_bounds = array<i64: 16, 128>}]} {
    %c0 = arith.constant 0 : index
    %c0_0 = arith.constant 0 : index
    %0 = vector.load %arg1[%c0, %c0_0] : memref<16x1024xbf16, #tpu.memory_space<vmem>>, vector<16x1024xbf16>
    %c0_1 = arith.constant 0 : index
    %c0_2 = arith.constant 0 : index
    %1 = vector.load %arg2[%c0_1, %c0_2] : memref<1024x128xbf16, #tpu.memory_space<vmem>>, vector<1024x128xbf16>
    %cst = arith.constant dense<0.000000e+00> : vector<16x128xf32>
    %2 = tpu.matmul %0, %1, %cst {dimension_numbers = #tpu.dot_dimension_numbers<[1], [0], [0], [1], [0, 0, 1, 1], [], []>} : vector<16x1024xbf16>, vector<1024x128xbf16>, vector<16x128xf32> -> vector<16x128xf32>
    %c0_3 = arith.constant 0 : index
    %c0_4 = arith.constant 0 : index
    %3 = vector.load %arg3[%c0_3, %c0_4] : memref<1x128xf32, #tpu.memory_space<vmem>>, vector<1x128xf32>
    %4 = vector.broadcast %3 : vector<1x128xf32> to vector<16x128xf32>
    %5 = arith.addf %2, %4 : vector<16x128xf32>
    %cst_5 = arith.constant 0.000000e+00 : f32
    %6 = vector.broadcast %cst_5 : f32 to vector<16x128xf32>
    %7 = arith.maximumf %5, %6 : vector<16x128xf32>
    %8 = arith.truncf %7 : vector<16x128xf32> to vector<16x128xbf16>
    %c0_6 = arith.constant 0 : index
    %c0_7 = arith.constant 0 : index
    %9 = vector.load %arg4[%c0_6, %c0_7] : memref<128x128xbf16, #tpu.memory_space<vmem>>, vector<128x128xbf16>
    %cst_8 = arith.constant dense<0.000000e+00> : vector<16x128xf32>
    %10 = tpu.matmul %8, %9, %cst_8 {dimension_numbers = #tpu.dot_dimension_numbers<[1], [0], [0], [1], [0, 0, 1, 1], [], []>} : vector<16x128xbf16>, vector<128x128xbf16>, vector<16x128xf32> -> vector<16x128xf32>
    %c0_9 = arith.constant 0 : index
    %c0_10 = arith.constant 0 : index
    %11 = vector.load %arg5[%c0_9, %c0_10] : memref<1x128xf32, #tpu.memory_space<vmem>>, vector<1x128xf32>
    %12 = vector.broadcast %11 : vector<1x128xf32> to vector<16x128xf32>
    %13 = arith.addf %10, %12 : vector<16x128xf32>
    %c0_11 = arith.constant 0 : index
    %c0_12 = arith.constant 0 : index
    %14 = vector.load %arg6[%c0_11, %c0_12] : memref<16x128xf32, #tpu.memory_space<vmem>>, vector<16x128xf32>
    tpu.vector_store %arg6[%c0_11, %c0_12], %13 {strides = array<i32>} : memref<16x128xf32, #tpu.memory_space<vmem>>, vector<16x128xf32>,
    return
  }
  func.func @transform_0(%arg0: i32) -> (i32, i32) {
    %c0_i32 = arith.constant 0 : i32
    %c0_i32_0 = arith.constant 0 : i32
    return %arg0, %c0_i32 : i32, i32
  }
  func.func @transform_1(%arg0: i32) -> (i32, i32) {
    %c0_i32 = arith.constant 0 : i32
    %c0_i32_0 = arith.constant 0 : i32
    %c0_i32_1 = arith.constant 0 : i32
    return %c0_i32, %c0_i32_0 : i32, i32
  }
  func.func @transform_2(%arg0: i32) -> (i32, i32) {
    %c0_i32 = arith.constant 0 : i32
    %c0_i32_0 = arith.constant 0 : i32
    %c0_i32_1 = arith.constant 0 : i32
    return %c0_i32, %c0_i32_0 : i32, i32
  }
  func.func @transform_3(%arg0: i32) -> (i32, i32) {
    %c0_i32 = arith.constant 0 : i32
    %c0_i32_0 = arith.constant 0 : i32
    %c0_i32_1 = arith.constant 0 : i32
    return %c0_i32, %c0_i32_0 : i32, i32
  }
  func.func @transform_4(%arg0: i32) -> (i32, i32) {
    %c0_i32 = arith.constant 0 : i32
    %c0_i32_0 = arith.constant 0 : i32
    %c0_i32_1 = arith.constant 0 : i32
    return %c0_i32, %c0_i32_0 : i32, i32
  }
  func.func @transform_5(%arg0: i32) -> (i32, i32) {
    %c0_i32 = arith.constant 0 : i32
    %c0_i32_0 = arith.constant 0 : i32
    return %arg0, %c0_i32 : i32, i32
  }
}

</mosaic_0001>

<llo_original>
// kernel: mlp_forward.1
$region0: #{mlp_forward.1}
  #allocation0 [shape = 'u32[]', space=smem, size = 0x4, offset = 0x4, fixed_abs, tag = 'smem constant byte address 0x4 - core index']
  #allocation1 [shape = 'u32[144,128]{1,0:T(1,128)}', space=vmem, size = 0x12000, scoped, tag = 'internal scratch']
  %s0 = inlined_call_operand.vmem [shape: bf16[16,1024], index: 0, kind: input, shape index: {}]
  %s1 = inlined_call_operand.hbm [shape: bf16[1024,128], index: 1, kind: input, shape index: {}]
  %s2 = inlined_call_operand.vmem [shape: f32[1,128], index: 2, kind: input, shape index: {}]
  %s3 = inlined_call_operand.vmem [shape: bf16[128,128], index: 3, kind: input, shape index: {}]
  %s4 = inlined_call_operand.vmem [shape: f32[1,128], index: 4, kind: input, shape index: {}]
  %s5 = inlined_call_operand.vmem [shape: f32[16,128], index: 5, kind: output, shape index: {}]
  %s6 = sld [smem:[#allocation0]]
  $region34: #{mlp_forward.1} parent=0
    _
  %s8 = ssub.s32 1, %s6
  %s9 = scalar_select 0, %s8, %s6
  $region1: #{mlp_forward.1} parent=0
    #allocation2 [shape = 'u8[262144]{0}', space=vmem, size = 0x40000, scoped, tag = 'input window, operand 1, single buffered']
    #allocation3 [shape = 's32[1]{0}', space=sflag, size = 0x4, scoped, tag = 'scoped memory for mlp_forward.1']
    %10 = vsyncpa [#allocation3], 0
    // Predicated region
    $region2: #{mlp_forward.1} parent=1 // pred_check
      _
    $region3: #{mlp_forward.1} parent=1 // pred_check_branch
      %12 = sbr.rel (0) target = $region5
    $region4: #{mlp_forward.1} parent=1 // pred_region
      _
    $region5: #{mlp_forward.1} parent=1 // pred_fallthru
      _
    // Predicated region
    $region6: #{mlp_forward.1} parent=1 // pred_check
      _
    $region7: #{mlp_forward.1} parent=1 // pred_check_branch
      %14 = sbr.rel (0) target = $region9
    $region8: #{mlp_forward.1} parent=1 // pred_region
      %s16 = ssub.s32 8192, 8192
      %17 = vsyncadd [#allocation3], %s16
      %s18 = sshll.u32 [#allocation2], 4
      %s19 = int_to_ptr.vmem [resolvable:$true] %s18
      %24 = dma.hbm_to_vmem [thread:$0]  %s1, 8192, %s19, [#allocation3], 64, 64, 4
    $region9: #{mlp_forward.1} parent=1 // pred_fallthru
      _
    // Predicated region
    $region10: #{mlp_forward.1} parent=1 // pred_check
      _
    $region11: #{mlp_forward.1} parent=1 // pred_check_branch
      %26 = sbr.rel (0) target = $region13
    $region12: #{mlp_forward.1} parent=1 // pred_region
      _
    $region13: #{mlp_forward.1} parent=1 // pred_fallthru
      _
    // Predicated region
    $region14: #{mlp_forward.1} parent=1 // pred_check
      _
    $region15: #{mlp_forward.1} parent=1 // pred_check_branch
      %28 = sbr.rel (0) target = $region17
    $region16: #{mlp_forward.1} parent=1 // pred_region
      _
    $region17: #{mlp_forward.1} parent=1 // pred_fallthru
      _
    // Predicated region
    $region18: #{mlp_forward.1} parent=1 // pred_check
      _
    $region19: #{mlp_forward.1} parent=1 // pred_check_branch
      %30 = sbr.rel (0) target = $region21
    $region20: #{mlp_forward.1} parent=1 // pred_region
      _
    $region21: #{mlp_forward.1} parent=1 // pred_fallthru
      _
    // Predicated region
    $region22: #{mlp_forward.1} parent=1 // pred_check
      _
    $region23: #{mlp_forward.1} parent=1 // pred_check_branch
      %32 = sbr.rel (0) target = $region25
    $region24: #{mlp_forward.1} parent=1 // pred_region
      %33 = dma.done [#allocation3], 8192
    $region25: #{mlp_forward.1} parent=1 // pred_fallthru
      _
    %v35 = vld [vmem:[%s0] sm:$0xff]
    %v36 = vld [vmem:[%s0 + $0x8] sm:$0xff]
    %v37 = vld [vmem:[%s0 + $0x10] sm:$0xff]
    %v38 = vld [vmem:[%s0 + $0x18] sm:$0xff]
    %v39 = vld [vmem:[%s0 + $0x20] sm:$0xff]
    %v40 = vld [vmem:[%s0 + $0x28] sm:$0xff]
    %v41 = vld [vmem:[%s0 + $0x30] sm:$0xff]
    %v42 = vld [vmem:[%s0 + $0x38] sm:$0xff]
    %v43 = vld [vmem:[#allocation2] sm:$0xf]
    %v44 = vld [vmem:[#allocation2 + $0x4] sm:$0xf]
    %v45 = vld [vmem:[#allocation2 + $0x8] sm:$0xf]
    %v46 = vld [vmem:[#allocation2 + $0xc] sm:$0xf]
    %v47 = vld [vmem:[#allocation2 + $0x10] sm:$0xf]
    %v48 = vld [vmem:[#allocation2 + $0x14] sm:$0xf]
    %v49 = vld [vmem:[#allocation2 + $0x18] sm:$0xf]
    %v50 = vld [vmem:[#allocation2 + $0x1c] sm:$0xf]
    %v51 = vld [vmem:[#allocation2 + $0x20] sm:$0xf]
    %v52 = vld [vmem:[#allocation2 + $0x24] sm:$0xf]
    %v53 = vld [vmem:[#allocation2 + $0x28] sm:$0xf]
    %v54 = vld [vmem:[#allocation2 + $0x2c] sm:$0xf]
    %v55 = vld [vmem:[#allocation2 + $0x30] sm:$0xf]
    %v56 = vld [vmem:[#allocation2 + $0x34] sm:$0xf]
    %v57 = vld [vmem:[#allocation2 + $0x38] sm:$0xf]
    %v58 = vld [vmem:[#allocation2 + $0x3c] sm:$0xf]
    %v59 = vld [vmem:[#allocation2 + $0x40] sm:$0xf]
    %v60 = vld [vmem:[#allocation2 + $0x44] sm:$0xf]
    %v61 = vld [vmem:[#allocation2 + $0x48] sm:$0xf]
    %v62 = vld [vmem:[#allocation2 + $0x4c] sm:$0xf]
    %v63 = vld [vmem:[#allocation2 + $0x50] sm:$0xf]
    %v64 = vld [vmem:[#allocation2 + $0x54] sm:$0xf]
    %v65 = vld [vmem:[#allocation2 + $0x58] sm:$0xf]
    %v66 = vld [vmem:[#allocation2 + $0x5c] sm:$0xf]
    %v67 = vld [vmem:[#allocation2 + $0x60] sm:$0xf]
    %v68 = vld [vmem:[#allocation2 + $0x64] sm:$0xf]
    %v69 = vld [vmem:[#allocation2 + $0x68] sm:$0xf]
    %v70 = vld [vmem:[#allocation2 + $0x6c] sm:$0xf]
    %v71 = vld [vmem:[#allocation2 + $0x70] sm:$0xf]
    %v72 = vld [vmem:[#allocation2 + $0x74] sm:$0xf]
    %v73 = vld [vmem:[#allocation2 + $0x78] sm:$0xf]
    %v74 = vld [vmem:[#allocation2 + $0x7c] sm:$0xf]
    %v75 = vld [vmem:[#allocation2 + $0x80] sm:$0xf]
    %v76 = vld [vmem:[#allocation2 + $0x84] sm:$0xf]
    %v77 = vld [vmem:[#allocation2 + $0x88] sm:$0xf]
    %v78 = vld [vmem:[#allocation2 + $0x8c] sm:$0xf]
    %v79 = vld [vmem:[#allocation2 + $0x90] sm:$0xf]
    %v80 = vld [vmem:[#allocation2 + $0x94] sm:$0xf]
    %v81 = vld [vmem:[#allocation2 + $0x98] sm:$0xf]
    %v82 = vld [vmem:[#allocation2 + $0x9c] sm:$0xf]
    %v83 = vld [vmem:[#allocation2 + $0xa0] sm:$0xf]
    %v84 = vld [vmem:[#allocation2 + $0xa4] sm:$0xf]
    %v85 = vld [vmem:[#allocation2 + $0xa8] sm:$0xf]
    %v86 = vld [vmem:[#allocation2 + $0xac] sm:$0xf]
    %v87 = vld [vmem:[#allocation2 + $0xb0] sm:$0xf]
    %v88 = vld [vmem:[#allocation2 + $0xb4] sm:$0xf]
    %v89 = vld [vmem:[#allocation2 + $0xb8] sm:$0xf]
    %v90 = vld [vmem:[#allocation2 + $0xbc] sm:$0xf]
    %v91 = vld [vmem:[#allocation2 + $0xc0] sm:$0xf]
    %v92 = vld [vmem:[#allocation2 + $0xc4] sm:$0xf]
    %v93 = vld [vmem:[#allocation2 + $0xc8] sm:$0xf]
    %v94 = vld [vmem:[#allocation2 + $0xcc] sm:$0xf]
    %v95 = vld [vmem:[#allocation2 + $0xd0] sm:$0xf]
    %v96 = vld [vmem:[#allocation2 + $0xd4] sm:$0xf]
    %v97 = vld [vmem:[#allocation2 + $0xd8] sm:$0xf]
    %v98 = vld [vmem:[#allocation2 + $0xdc] sm:$0xf]
    %v99 = vld [vmem:[#allocation2 + $0xe0] sm:$0xf]
    %v100 = vld [vmem:[#allocation2 + $0xe4] sm:$0xf]
    %v101 = vld [vmem:[#allocation2 + $0xe8] sm:$0xf]
    %v102 = vld [vmem:[#allocation2 + $0xec] sm:$0xf]
    %v103 = vld [vmem:[#allocation2 + $0xf0] sm:$0xf]
    %v104 = vld [vmem:[#allocation2 + $0xf4] sm:$0xf]
    %v105 = vld [vmem:[#allocation2 + $0xf8] sm:$0xf]
    %v106 = vld [vmem:[#allocation2 + $0xfc] sm:$0xf]
    %v107 = vld [vmem:[#allocation2 + $0x100] sm:$0xf]
    %v108 = vld [vmem:[#allocation2 + $0x104] sm:$0xf]
    %v109 = vld [vmem:[#allocation2 + $0x108] sm:$0xf]
    %v110 = vld [vmem:[#allocation2 + $0x10c] sm:$0xf]
    %v111 = vld [vmem:[#allocation2 + $0x110] sm:$0xf]
    %v112 = vld [vmem:[#allocation2 + $0x114] sm:$0xf]
    %v113 = vld [vmem:[#allocation2 + $0x118] sm:$0xf]
    %v114 = vld [vmem:[#allocation2 + $0x11c] sm:$0xf]
    %v115 = vld [vmem:[#allocation2 + $0x120] sm:$0xf]
    %v116 = vld [vmem:[#allocation2 + $0x124] sm:$0xf]
    %v117 = vld [vmem:[#allocation2 + $0x128] sm:$0xf]
    %v118 = vld [vmem:[#allocation2 + $0x12c] sm:$0xf]
    %v119 = vld [vmem:[#allocation2 + $0x130] sm:$0xf]
    %v120 = vld [vmem:[#allocation2 + $0x134] sm:$0xf]
    %v121 = vld [vmem:[#allocation2 + $0x138] sm:$0xf]
    %v122 = vld [vmem:[#allocation2 + $0x13c] sm:$0xf]
    %v123 = vld [vmem:[#allocation2 + $0x140] sm:$0xf]
    %v124 = vld [vmem:[#allocation2 + $0x144] sm:$0xf]
    %v125 = vld [vmem:[#allocation2 + $0x148] sm:$0xf]
    %v126 = vld [vmem:[#allocation2 + $0x14c] sm:$0xf]
    %v127 = vld [vmem:[#allocation2 + $0x150] sm:$0xf]
    %v128 = vld [vmem:[#allocation2 + $0x154] sm:$0xf]
    %v129 = vld [vmem:[#allocation2 + $0x158] sm:$0xf]
    %v130 = vld [vmem:[#allocation2 + $0x15c] sm:$0xf]
    %v131 = vld [vmem:[#allocation2 + $0x160] sm:$0xf]
    %v132 = vld [vmem:[#allocation2 + $0x164] sm:$0xf]
    %v133 = vld [vmem:[#allocation2 + $0x168] sm:$0xf]
    %v134 = vld [vmem:[#allocation2 + $0x16c] sm:$0xf]
    %v135 = vld [vmem:[#allocation2 + $0x170] sm:$0xf]
    %v136 = vld [vmem:[#allocation2 + $0x174] sm:$0xf]
    %v137 = vld [vmem:[#allocation2 + $0x178] sm:$0xf]
    %v138 = vld [vmem:[#allocation2 + $0x17c] sm:$0xf]
    %v139 = vld [vmem:[#allocation2 + $0x180] sm:$0xf]
    %v140 = vld [vmem:[#allocation2 + $0x184] sm:$0xf]
    %v141 = vld [vmem:[#allocation2 + $0x188] sm:$0xf]
    %v142 = vld [vmem:[#allocation2 + $0x18c] sm:$0xf]
    %v143 = vld [vmem:[#allocation2 + $0x190] sm:$0xf]
    %v144 = vld [vmem:[#allocation2 + $0x194] sm:$0xf]
    %v145 = vld [vmem:[#allocation2 + $0x198] sm:$0xf]
    %v146 = vld [vmem:[#allocation2 + $0x19c] sm:$0xf]
    %v147 = vld [vmem:[#allocation2 + $0x1a0] sm:$0xf]
    %v148 = vld [vmem:[#allocation2 + $0x1a4] sm:$0xf]
    %v149 = vld [vmem:[#allocation2 + $0x1a8] sm:$0xf]
    %v150 = vld [vmem:[#allocation2 + $0x1ac] sm:$0xf]
    %v151 = vld [vmem:[#allocation2 + $0x1b0] sm:$0xf]
    %v152 = vld [vmem:[#allocation2 + $0x1b4] sm:$0xf]
    %v153 = vld [vmem:[#allocation2 + $0x1b8] sm:$0xf]
    %v154 = vld [vmem:[#allocation2 + $0x1bc] sm:$0xf]
    %v155 = vld [vmem:[#allocation2 + $0x1c0] sm:$0xf]
    %v156 = vld [vmem:[#allocation2 + $0x1c4] sm:$0xf]
    %v157 = vld [vmem:[#allocation2 + $0x1c8] sm:$0xf]
    %v158 = vld [vmem:[#allocation2 + $0x1cc] sm:$0xf]
    %v159 = vld [vmem:[#allocation2 + $0x1d0] sm:$0xf]
    %v160 = vld [vmem:[#allocation2 + $0x1d4] sm:$0xf]
    %v161 = vld [vmem:[#allocation2 + $0x1d8] sm:$0xf]
    %v162 = vld [vmem:[#allocation2 + $0x1dc] sm:$0xf]
    %v163 = vld [vmem:[#allocation2 + $0x1e0] sm:$0xf]
    %v164 = vld [vmem:[#allocation2 + $0x1e4] sm:$0xf]
    %v165 = vld [vmem:[#allocation2 + $0x1e8] sm:$0xf]
    %v166 = vld [vmem:[#allocation2 + $0x1ec] sm:$0xf]
    %v167 = vld [vmem:[#allocation2 + $0x1f0] sm:$0xf]
    %v168 = vld [vmem:[#allocation2 + $0x1f4] sm:$0xf]
    %v169 = vld [vmem:[#allocation2 + $0x1f8] sm:$0xf]
    %v170 = vld [vmem:[#allocation2 + $0x1fc] sm:$0xf]
    %v171 = vld [vmem:[%s2] sm:$0x1]
    %v173 = vlaneseq
    %v174 = vshrl.u32 %v173, 7
    %v175 = vsub.s32 0, %v174
    %v176 = vrot.slane %v171, %v175
    %v186 = vunpack.c.l.b16 %v35
    %v187 = vunpack.c.h.b16 %v35
    %v188 = vunpack.c.l.b16 %v36
    %v189 = vunpack.c.h.b16 %v36
    %v190 = vunpack.c.l.b16 %v37
    %v191 = vunpack.c.h.b16 %v37
    %v192 = vunpack.c.l.b16 %v38
    %v193 = vunpack.c.h.b16 %v38
    %v194 = vunpack.c.l.b16 %v39
    %v195 = vunpack.c.h.b16 %v39
    %v196 = vunpack.c.l.b16 %v40
    %v197 = vunpack.c.h.b16 %v40
    %v198 = vunpack.c.l.b16 %v41
    %v199 = vunpack.c.h.b16 %v41
    %v200 = vunpack.c.l.b16 %v42
    %v201 = vunpack.c.h.b16 %v42
    %v202 = vpack.c.b16 %v194, %v186
    %v203 = vpack.c.b16 %v195, %v187
    %v204 = vpack.c.b16 %v196, %v188
    %v205 = vpack.c.b16 %v197, %v189
    %v206 = vpack.c.b16 %v198, %v190
    %v207 = vpack.c.b16 %v199, %v191
    %v208 = vpack.c.b16 %v200, %v192
    %v209 = vpack.c.b16 %v201, %v193
    %v346 = vunpack.c.l.b16 %v43
    %v347 = vunpack.c.l.b16 %v44
    %v348 = vunpack.c.l.b16 %v45
    %v349 = vunpack.c.l.b16 %v46
    %v350 = vunpack.c.l.b16 %v47
    %v351 = vunpack.c.l.b16 %v48
    %v352 = vunpack.c.l.b16 %v49
    %v353 = vunpack.c.l.b16 %v50
    %v354 = vunpack.c.l.b16 %v51
    %v355 = vunpack.c.l.b16 %v52
    %v356 = vunpack.c.l.b16 %v53
    %v357 = vunpack.c.l.b16 %v54
    %v358 = vunpack.c.l.b16 %v55
    %v359 = vunpack.c.l.b16 %v56
    %v360 = vunpack.c.l.b16 %v57
    %v361 = vunpack.c.l.b16 %v58
    %v362 = vunpack.c.l.b16 %v59
    %v363 = vunpack.c.l.b16 %v60
    %v364 = vunpack.c.l.b16 %v61
    %v365 = vunpack.c.l.b16 %v62
    %v366 = vunpack.c.l.b16 %v63
    %v367 = vunpack.c.l.b16 %v64
    %v368 = vunpack.c.l.b16 %v65
    %v369 = vunpack.c.l.b16 %v66
    %v370 = vunpack.c.l.b16 %v67
    %v371 = vunpack.c.l.b16 %v68
    %v372 = vunpack.c.l.b16 %v69
    %v373 = vunpack.c.l.b16 %v70
    %v374 = vunpack.c.l.b16 %v71
    %v375 = vunpack.c.l.b16 %v72
    %v376 = vunpack.c.l.b16 %v73
    %v377 = vunpack.c.l.b16 %v74
    %v378 = vunpack.c.l.b16 %v75
    %v379 = vunpack.c.l.b16 %v76
    %v380 = vunpack.c.l.b16 %v77
    %v381 = vunpack.c.l.b16 %v78
    %v382 = vunpack.c.l.b16 %v79
    %v383 = vunpack.c.l.b16 %v80
    %v384 = vunpack.c.l.b16 %v81
    %v385 = vunpack.c.l.b16 %v82
    %v386 = vunpack.c.l.b16 %v83
    %v387 = vunpack.c.l.b16 %v84
    %v388 = vunpack.c.l.b16 %v85
    %v389 = vunpack.c.l.b16 %v86
    %v390 = vunpack.c.l.b16 %v87
    %v391 = vunpack.c.l.b16 %v88
    %v392 = vunpack.c.l.b16 %v89
    %v393 = vunpack.c.l.b16 %v90
    %v394 = vunpack.c.l.b16 %v91
    %v395 = vunpack.c.l.b16 %v92
    %v396 = vunpack.c.l.b16 %v93
    %v397 = vunpack.c.l.b16 %v94
    %v398 = vunpack.c.l.b16 %v95
    %v399 = vunpack.c.l.b16 %v96
    %v400 = vunpack.c.l.b16 %v97
    %v401 = vunpack.c.l.b16 %v98
    %v402 = vunpack.c.l.b16 %v99
    %v403 = vunpack.c.l.b16 %v100
    %v404 = vunpack.c.l.b16 %v101
    %v405 = vunpack.c.l.b16 %v102
    %v406 = vunpack.c.l.b16 %v103
    %v407 = vunpack.c.l.b16 %v104
    %v408 = vunpack.c.l.b16 %v105
    %v409 = vunpack.c.l.b16 %v106
    %v410 = vunpack.c.l.b16 %v107
    %v411 = vunpack.c.l.b16 %v108
    %v412 = vunpack.c.l.b16 %v109
    %v413 = vunpack.c.l.b16 %v110
    %v414 = vunpack.c.l.b16 %v111
    %v415 = vunpack.c.l.b16 %v112
    %v416 = vunpack.c.l.b16 %v113
    %v417 = vunpack.c.l.b16 %v114
    %v418 = vunpack.c.l.b16 %v115
    %v419 = vunpack.c.l.b16 %v116
    %v420 = vunpack.c.l.b16 %v117
    %v421 = vunpack.c.l.b16 %v118
    %v422 = vunpack.c.l.b16 %v119
    %v423 = vunpack.c.l.b16 %v120
    %v424 = vunpack.c.l.b16 %v121
    %v425 = vunpack.c.l.b16 %v122
    %v426 = vunpack.c.l.b16 %v123
    %v427 = vunpack.c.l.b16 %v124
    %v428 = vunpack.c.l.b16 %v125
    %v429 = vunpack.c.l.b16 %v126
    %v430 = vunpack.c.l.b16 %v127
    %v431 = vunpack.c.l.b16 %v128
    %v432 = vunpack.c.l.b16 %v129
    %v433 = vunpack.c.l.b16 %v130
    %v434 = vunpack.c.l.b16 %v131
    %v435 = vunpack.c.l.b16 %v132
    %v436 = vunpack.c.l.b16 %v133
    %v437 = vunpack.c.l.b16 %v134
    %v438 = vunpack.c.l.b16 %v135
    %v439 = vunpack.c.l.b16 %v136
    %v440 = vunpack.c.l.b16 %v137
    %v441 = vunpack.c.l.b16 %v138
    %v442 = vunpack.c.l.b16 %v139
    %v443 = vunpack.c.l.b16 %v140
    %v444 = vunpack.c.l.b16 %v141
    %v445 = vunpack.c.l.b16 %v142
    %v446 = vunpack.c.l.b16 %v143
    %v447 = vunpack.c.l.b16 %v144
    %v448 = vunpack.c.l.b16 %v145
    %v449 = vunpack.c.l.b16 %v146
    %v450 = vunpack.c.l.b16 %v147
    %v451 = vunpack.c.l.b16 %v148
    %v452 = vunpack.c.l.b16 %v149
    %v453 = vunpack.c.l.b16 %v150
    %v454 = vunpack.c.l.b16 %v151
    %v455 = vunpack.c.l.b16 %v152
    %v456 = vunpack.c.l.b16 %v153
    %v457 = vunpack.c.l.b16 %v154
    %v458 = vunpack.c.l.b16 %v155
    %v459 = vunpack.c.l.b16 %v156
    %v460 = vunpack.c.l.b16 %v157
    %v461 = vunpack.c.l.b16 %v158
    %v462 = vunpack.c.l.b16 %v159
    %v463 = vunpack.c.l.b16 %v160
    %v464 = vunpack.c.l.b16 %v161
    %v465 = vunpack.c.l.b16 %v162
    %v466 = vunpack.c.l.b16 %v163
    %v467 = vunpack.c.l.b16 %v164
    %v468 = vunpack.c.l.b16 %v165
    %v469 = vunpack.c.l.b16 %v166
    %v470 = vunpack.c.l.b16 %v167
    %v471 = vunpack.c.l.b16 %v168
    %v472 = vunpack.c.l.b16 %v169
    %v473 = vunpack.c.l.b16 %v170
    %v474 = vpack.c.b16 %v347, %v346
    %v475 = vpack.c.b16 %v349, %v348
    %v476 = vpack.c.b16 %v351, %v350
    %v477 = vpack.c.b16 %v353, %v352
    %v478 = vpack.c.b16 %v355, %v354
    %v479 = vpack.c.b16 %v357, %v356
    %v480 = vpack.c.b16 %v359, %v358
    %v481 = vpack.c.b16 %v361, %v360
    %v482 = vpack.c.b16 %v363, %v362
    %v483 = vpack.c.b16 %v365, %v364
    %v484 = vpack.c.b16 %v367, %v366
    %v485 = vpack.c.b16 %v369, %v368
    %v486 = vpack.c.b16 %v371, %v370
    %v487 = vpack.c.b16 %v373, %v372
    %v488 = vpack.c.b16 %v375, %v374
    %v489 = vpack.c.b16 %v377, %v376
    %v490 = vpack.c.b16 %v379, %v378
    %v491 = vpack.c.b16 %v381, %v380
    %v492 = vpack.c.b16 %v383, %v382
    %v493 = vpack.c.b16 %v385, %v384
    %v494 = vpack.c.b16 %v387, %v386
    %v495 = vpack.c.b16 %v389, %v388
    %v496 = vpack.c.b16 %v391, %v390
    %v497 = vpack.c.b16 %v393, %v392
    %v498 = vpack.c.b16 %v395, %v394
    %v499 = vpack.c.b16 %v397, %v396
    %v500 = vpack.c.b16 %v399, %v398
    %v501 = vpack.c.b16 %v401, %v400
    %v502 = vpack.c.b16 %v403, %v402
    %v503 = vpack.c.b16 %v405, %v404
    %v504 = vpack.c.b16 %v407, %v406
    %v505 = vpack.c.b16 %v409, %v408
    %v506 = vpack.c.b16 %v411, %v410
    %v507 = vpack.c.b16 %v413, %v412
    %v508 = vpack.c.b16 %v415, %v414
    %v509 = vpack.c.b16 %v417, %v416
    %v510 = vpack.c.b16 %v419, %v418
    %v511 = vpack.c.b16 %v421, %v420
    %v512 = vpack.c.b16 %v423, %v422
    %v513 = vpack.c.b16 %v425, %v424
    %v514 = vpack.c.b16 %v427, %v426
    %v515 = vpack.c.b16 %v429, %v428
    %v516 = vpack.c.b16 %v431, %v430
    %v517 = vpack.c.b16 %v433, %v432
    %v518 = vpack.c.b16 %v435, %v434
    %v519 = vpack.c.b16 %v437, %v436
    %v520 = vpack.c.b16 %v439, %v438
    %v521 = vpack.c.b16 %v441, %v440
    %v522 = vpack.c.b16 %v443, %v442
    %v523 = vpack.c.b16 %v445, %v444
    %v524 = vpack.c.b16 %v447, %v446
    %v525 = vpack.c.b16 %v449, %v448
    %v526 = vpack.c.b16 %v451, %v450
    %v527 = vpack.c.b16 %v453, %v452
    %v528 = vpack.c.b16 %v455, %v454
    %v529 = vpack.c.b16 %v457, %v456
    %v530 = vpack.c.b16 %v459, %v458
    %v531 = vpack.c.b16 %v461, %v460
    %v532 = vpack.c.b16 %v463, %v462
    %v533 = vpack.c.b16 %v465, %v464
    %v534 = vpack.c.b16 %v467, %v466
    %v535 = vpack.c.b16 %v469, %v468
    %v536 = vpack.c.b16 %v471, %v470
    %v537 = vpack.c.b16 %v473, %v472
    %602 = vmatprep.subr.bf16.mxu0 0
    %603 = vmatpush1.bf16.msra.mxu0 %v474
    %604 = vmatprep.subr.bf16.mxu0 0
    %605 = vmatpush1.bf16.msra.mxu0 %v475
    %606 = vmatprep.subr.bf16.mxu0 0
    %607 = vmatpush1.bf16.msra.mxu0 %v476
    %608 = vmatprep.subr.bf16.mxu0 0
    %609 = vmatpush1.bf16.msra.mxu0 %v477
    %610 = vmatprep.subr.bf16.mxu0 0
    %611 = vmatpush1.bf16.msra.mxu0 %v478
    %612 = vmatprep.subr.bf16.mxu0 0
    %613 = vmatpush1.bf16.msra.mxu0 %v479
    %614 = vmatprep.subr.bf16.mxu0 0
    %615 = vmatpush1.bf16.msra.mxu0 %v480
    %616 = vmatprep.subr.bf16.mxu0 0
    %617 = vmatpush1.bf16.msra.mxu0 %v481
    %618 = vmatprep.subr.bf16.mxu0 0
    %619 = vmatpush1.bf16.msra.mxu0 %v482
    %620 = vmatprep.subr.bf16.mxu0 0
    %621 = vmatpush1.bf16.msra.mxu0 %v483
    %622 = vmatprep.subr.bf16.mxu0 0
    %623 = vmatpush1.bf16.msra.mxu0 %v484
    %624 = vmatprep.subr.bf16.mxu0 0
    %625 = vmatpush1.bf16.msra.mxu0 %v485
    %626 = vmatprep.subr.bf16.mxu0 0
    %627 = vmatpush1.bf16.msra.mxu0 %v486
    %628 = vmatprep.subr.bf16.mxu0 0
    %629 = vmatpush1.bf16.msra.mxu0 %v487
    %630 = vmatprep.subr.bf16.mxu0 0
    %631 = vmatpush1.bf16.msra.mxu0 %v488
    %632 = vmatprep.subr.bf16.mxu0 0
    %633 = vmatpush1.bf16.msra.mxu0 %v489
    %634 = vmatprep.mubr.bf16.mxu0 %v203
    %635 = vmatmul.mubr.bf16.gmra.mrb[0].mxu0 %v202
    %v636 = vpop.f32.mrb[0].mxu0
    %v637 = vadd.f32 %v176, %v636
    %v638 = vpop.f32.mrb[0].mxu0
    %v639 = vpop.f32.mrb[0].mxu0
    %v640 = vadd.f32 %v176, %v639
    %v641 = vpop.f32.mrb[0].mxu0
    %642 = vdwg.mxu0
    %643 = vmatprep.subr.bf16.mxu0 0
    %644 = vmatpush1.bf16.msra.mxu0 %v490
    %645 = vmatprep.subr.bf16.mxu0 0
    %646 = vmatpush1.bf16.msra.mxu0 %v491
    %647 = vmatprep.subr.bf16.mxu0 0
    %648 = vmatpush1.bf16.msra.mxu0 %v492
    %649 = vmatprep.subr.bf16.mxu0 0
    %650 = vmatpush1.bf16.msra.mxu0 %v493
    %651 = vmatprep.subr.bf16.mxu0 0
    %652 = vmatpush1.bf16.msra.mxu0 %v494
    %653 = vmatprep.subr.bf16.mxu0 0
    %654 = vmatpush1.bf16.msra.mxu0 %v495
    %655 = vmatprep.subr.bf16.mxu0 0
    %656 = vmatpush1.bf16.msra.mxu0 %v496
    %657 = vmatprep.subr.bf16.mxu0 0
    %658 = vmatpush1.bf16.msra.mxu0 %v497
    %659 = vmatprep.subr.bf16.mxu0 0
    %660 = vmatpush1.bf16.msra.mxu0 %v498
    %661 = vmatprep.subr.bf16.mxu0 0
    %662 = vmatpush1.bf16.msra.mxu0 %v499
    %663 = vmatprep.subr.bf16.mxu0 0
    %664 = vmatpush1.bf16.msra.mxu0 %v500
    %665 = vmatprep.subr.bf16.mxu0 0
    %666 = vmatpush1.bf16.msra.mxu0 %v501
    %667 = vmatprep.subr.bf16.mxu0 0
    %668 = vmatpush1.bf16.msra.mxu0 %v502
    %669 = vmatprep.subr.bf16.mxu0 0
    %670 = vmatpush1.bf16.msra.mxu0 %v503
    %671 = vmatprep.subr.bf16.mxu0 0
    %672 = vmatpush1.bf16.msra.mxu0 %v504
    %673 = vmatprep.subr.bf16.mxu0 0
    %674 = vmatpush1.bf16.msra.mxu0 %v505
    %675 = vmatprep.mubr.bf16.mxu0 %v205
    %676 = vmatmul.mubr.bf16.gmra.mrb[0].mxu0 %v204
    %v677 = vpop.f32.mrb[0].mxu0
    %v678 = vadd.f32 %v637, %v677
    %v679 = vpop.f32.mrb[0].mxu0
    %v680 = vpop.f32.mrb[0].mxu0
    %v681 = vadd.f32 %v640, %v680
    %v682 = vpop.f32.mrb[0].mxu0
    %683 = vdwg.mxu0
    %684 = vmatprep.subr.bf16.mxu0 0
    %685 = vmatpush1.bf16.msra.mxu0 %v506
    %686 = vmatprep.subr.bf16.mxu0 0
    %687 = vmatpush1.bf16.msra.mxu0 %v507
    %688 = vmatprep.subr.bf16.mxu0 0
    %689 = vmatpush1.bf16.msra.mxu0 %v508
    %690 = vmatprep.subr.bf16.mxu0 0
    %691 = vmatpush1.bf16.msra.mxu0 %v509
    %692 = vmatprep.subr.bf16.mxu0 0
    %693 = vmatpush1.bf16.msra.mxu0 %v510
    %694 = vmatprep.subr.bf16.mxu0 0
    %695 = vmatpush1.bf16.msra.mxu0 %v511
    %696 = vmatprep.subr.bf16.mxu0 0
    %697 = vmatpush1.bf16.msra.mxu0 %v512
    %698 = vmatprep.subr.bf16.mxu0 0
    %699 = vmatpush1.bf16.msra.mxu0 %v513
    %700 = vmatprep.subr.bf16.mxu0 0
    %701 = vmatpush1.bf16.msra.mxu0 %v514
    %702 = vmatprep.subr.bf16.mxu0 0
    %703 = vmatpush1.bf16.msra.mxu0 %v515
    %704 = vmatprep.subr.bf16.mxu0 0
    %705 = vmatpush1.bf16.msra.mxu0 %v516
    %706 = vmatprep.subr.bf16.mxu0 0
    %707 = vmatpush1.bf16.msra.mxu0 %v517
    %708 = vmatprep.subr.bf16.mxu0 0
    %709 = vmatpush1.bf16.msra.mxu0 %v518
    %710 = vmatprep.subr.bf16.mxu0 0
    %711 = vmatpush1.bf16.msra.mxu0 %v519
    %712 = vmatprep.subr.bf16.mxu0 0
    %713 = vmatpush1.bf16.msra.mxu0 %v520
    %714 = vmatprep.subr.bf16.mxu0 0
    %715 = vmatpush1.bf16.msra.mxu0 %v521
    %716 = vmatprep.mubr.bf16.mxu0 %v207
    %717 = vmatmul.mubr.bf16.gmra.mrb[0].mxu0 %v206
    %v718 = vpop.f32.mrb[0].mxu0
    %v719 = vadd.f32 %v678, %v718
    %v720 = vpop.f32.mrb[0].mxu0
    %v721 = vpop.f32.mrb[0].mxu0
    %v722 = vadd.f32 %v681, %v721
    %v723 = vpop.f32.mrb[0].mxu0
    %724 = vdwg.mxu0
    %725 = vmatprep.subr.bf16.mxu0 0
    %726 = vmatpush1.bf16.msra.mxu0 %v522
    %727 = vmatprep.subr.bf16.mxu0 0
    %728 = vmatpush1.bf16.msra.mxu0 %v523
    %729 = vmatprep.subr.bf16.mxu0 0
    %730 = vmatpush1.bf16.msra.mxu0 %v524
    %731 = vmatprep.subr.bf16.mxu0 0
    %732 = vmatpush1.bf16.msra.mxu0 %v525
    %733 = vmatprep.subr.bf16.mxu0 0
    %734 = vmatpush1.bf16.msra.mxu0 %v526
    %735 = vmatprep.subr.bf16.mxu0 0
    %736 = vmatpush1.bf16.msra.mxu0 %v527
    %737 = vmatprep.subr.bf16.mxu0 0
    %738 = vmatpush1.bf16.msra.mxu0 %v528
    %739 = vmatprep.subr.bf16.mxu0 0
    %740 = vmatpush1.bf16.msra.mxu0 %v529
    %741 = vmatprep.subr.bf16.mxu0 0
    %742 = vmatpush1.bf16.msra.mxu0 %v530
    %743 = vmatprep.subr.bf16.mxu0 0
    %744 = vmatpush1.bf16.msra.mxu0 %v531
    %745 = vmatprep.subr.bf16.mxu0 0
    %746 = vmatpush1.bf16.msra.mxu0 %v532
    %747 = vmatprep.subr.bf16.mxu0 0
    %748 = vmatpush1.bf16.msra.mxu0 %v533
    %749 = vmatprep.subr.bf16.mxu0 0
    %750 = vmatpush1.bf16.msra.mxu0 %v534
    %751 = vmatprep.subr.bf16.mxu0 0
    %752 = vmatpush1.bf16.msra.mxu0 %v535
    %753 = vmatprep.subr.bf16.mxu0 0
    %754 = vmatpush1.bf16.msra.mxu0 %v536
    %755 = vmatprep.subr.bf16.mxu0 0
    %756 = vmatpush1.bf16.msra.mxu0 %v537
    %757 = vmatprep.mubr.bf16.mxu0 %v209
    %758 = vmatmul.mubr.bf16.gmra.mrb[0].mxu0 %v208
    %v759 = vpop.f32.mrb[0].mxu0
    %v760 = vadd.f32 %v719, %v759
    %v761 = vpop.f32.mrb[0].mxu0
    %v762 = vpop.f32.mrb[0].mxu0
    %v763 = vadd.f32 %v722, %v762
    %v764 = vpop.f32.mrb[0].mxu0
    %765 = vdwg.mxu0
    %v766 = vmax.f32 %v760, 0.0
    %v767 = vmax.f32 %v763, 0.0
    %v768 = vpack.c.bf16 %v767, %v766
    %v769 = vld [vmem:[%s3] sm:$0xf]
    %v770 = vld [vmem:[%s3 + $0x4] sm:$0xf]
    %v771 = vld [vmem:[%s3 + $0x8] sm:$0xf]
    %v772 = vld [vmem:[%s3 + $0xc] sm:$0xf]
    %v773 = vld [vmem:[%s3 + $0x10] sm:$0xf]
    %v774 = vld [vmem:[%s3 + $0x14] sm:$0xf]
    %v775 = vld [vmem:[%s3 + $0x18] sm:$0xf]
    %v776 = vld [vmem:[%s3 + $0x1c] sm:$0xf]
    %v777 = vld [vmem:[%s3 + $0x20] sm:$0xf]
    %v778 = vld [vmem:[%s3 + $0x24] sm:$0xf]
    %v779 = vld [vmem:[%s3 + $0x28] sm:$0xf]
    %v780 = vld [vmem:[%s3 + $0x2c] sm:$0xf]
    %v781 = vld [vmem:[%s3 + $0x30] sm:$0xf]
    %v782 = vld [vmem:[%s3 + $0x34] sm:$0xf]
    %v783 = vld [vmem:[%s3 + $0x38] sm:$0xf]
    %v784 = vld [vmem:[%s3 + $0x3c] sm:$0xf]
    %v785 = vld [vmem:[%s4] sm:$0x1]
    %v787 = vlaneseq
    %v788 = vshrl.u32 %v787, 7
    %v789 = vsub.s32 0, %v788
    %v790 = vrot.slane %v785, %v789
    %v808 = vunpack.c.l.b16 %v769
    %v809 = vunpack.c.l.b16 %v770
    %v810 = vunpack.c.l.b16 %v771
    %v811 = vunpack.c.l.b16 %v772
    %v812 = vunpack.c.l.b16 %v773
    %v813 = vunpack.c.l.b16 %v774
    %v814 = vunpack.c.l.b16 %v775
    %v815 = vunpack.c.l.b16 %v776
    %v816 = vunpack.c.l.b16 %v777
    %v817 = vunpack.c.l.b16 %v778
    %v818 = vunpack.c.l.b16 %v779
    %v819 = vunpack.c.l.b16 %v780
    %v820 = vunpack.c.l.b16 %v781
    %v821 = vunpack.c.l.b16 %v782
    %v822 = vunpack.c.l.b16 %v783
    %v823 = vunpack.c.l.b16 %v784
    %v824 = vpack.c.b16 %v809, %v808
    %v825 = vpack.c.b16 %v811, %v810
    %v826 = vpack.c.b16 %v813, %v812
    %v827 = vpack.c.b16 %v815, %v814
    %v828 = vpack.c.b16 %v817, %v816
    %v829 = vpack.c.b16 %v819, %v818
    %v830 = vpack.c.b16 %v821, %v820
    %v831 = vpack.c.b16 %v823, %v822
    %840 = vmatprep.subr.bf16.mxu0 0
    %841 = vmatpush1.bf16.msra.mxu0 %v824
    %842 = vmatprep.subr.bf16.mxu0 0
    %843 = vmatpush1.bf16.msra.mxu0 %v825
    %844 = vmatprep.subr.bf16.mxu0 0
    %845 = vmatpush1.bf16.msra.mxu0 %v826
    %846 = vmatprep.subr.bf16.mxu0 0
    %847 = vmatpush1.bf16.msra.mxu0 %v827
    %848 = vmatprep.subr.bf16.mxu0 0
    %849 = vmatpush1.bf16.msra.mxu0 %v828
    %850 = vmatprep.subr.bf16.mxu0 0
    %851 = vmatpush1.bf16.msra.mxu0 %v829
    %852 = vmatprep.subr.bf16.mxu0 0
    %853 = vmatpush1.bf16.msra.mxu0 %v830
    %854 = vmatprep.subr.bf16.mxu0 0
    %855 = vmatpush1.bf16.msra.mxu0 %v831
    %856 = vmatprep.subr.bf16.mxu0 0
    %857 = vmatpush1.bf16.msra.mxu0 0
    %858 = vmatprep.subr.bf16.mxu0 0
    %859 = vmatpush1.bf16.msra.mxu0 0
    %860 = vmatprep.subr.bf16.mxu0 0
    %861 = vmatpush1.bf16.msra.mxu0 0
    %862 = vmatprep.subr.bf16.mxu0 0
    %863 = vmatpush1.bf16.msra.mxu0 0
    %864 = vmatprep.subr.bf16.mxu0 0
    %865 = vmatpush1.bf16.msra.mxu0 0
    %866 = vmatprep.subr.bf16.mxu0 0
    %867 = vmatpush1.bf16.msra.mxu0 0
    %868 = vmatprep.subr.bf16.mxu0 0
    %869 = vmatpush1.bf16.msra.mxu0 0
    %870 = vmatprep.subr.bf16.mxu0 0
    %871 = vmatpush1.bf16.msra.mxu0 0
    %872 = vmatprep.mubr.bf16.mxu0 0
    %873 = vmatmul.mubr.bf16.gmra.mrb[0].mxu0 %v768
    %v874 = vpop.f32.mrb[0].mxu0
    %v875 = vadd.f32 %v790, %v874
    %v876 = vpop.f32.mrb[0].mxu0
    %v877 = vpop.f32.mrb[0].mxu0
    %v878 = vadd.f32 %v790, %v877
    %v879 = vpop.f32.mrb[0].mxu0
    %880 = vdwg.mxu0
    %881 = vst [vmem:[%s5] sm:$0xff] %v875
    %882 = vst [vmem:[%s5 + $0x8] sm:$0xff] %v878
    // Predicated region
    $region26: #{mlp_forward.1} parent=1 // pred_check
      _
    $region27: #{mlp_forward.1} parent=1 // pred_check_branch
      %884 = sbr.rel (0) target = $region29
    $region28: #{mlp_forward.1} parent=1 // pred_region
      _
    $region29: #{mlp_forward.1} parent=1 // pred_fallthru
      _
    // Predicated region
    $region30: #{mlp_forward.1} parent=1 // pred_check
      _
    $region31: #{mlp_forward.1} parent=1 // pred_check_branch
      %886 = sbr.rel (0) target = $region33
    $region32: #{mlp_forward.1} parent=1 // pred_region
      _
    $region33: #{mlp_forward.1} parent=1 // pred_fallthru
      _
    %887 = vsyncpa [#allocation3], 1

// kernel: mlp_forward.1
$region0: #{mlp_forward.1}
  #allocation0 [shape = 'u32[]', space=smem, size = 0x4, offset = 0x4, fixed_abs, tag = 'smem constant byte address 0x4 - core index']
  #allocation1 [shape = 'u32[144,128]{1,0:T(1,128)}', space=vmem, size = 0x12000, scoped, tag = 'internal scratch']
  %s0 = inlined_call_operand.vmem [shape: bf16[16,1024], index: 0, kind: input, shape index: {}]
  %s1 = inlined_call_operand.hbm [shape: bf16[1024,128], index: 1, kind: input, shape index: {}]
  %s2 = inlined_call_operand.vmem [shape: f32[1,128], index: 2, kind: input, shape index: {}]
  %s3 = inlined_call_operand.vmem [shape: bf16[128,128], index: 3, kind: input, shape index: {}]
  %s4 = inlined_call_operand.vmem [shape: f32[1,128], index: 4, kind: input, shape index: {}]
  %s5 = inlined_call_operand.vmem [shape: f32[16,128], index: 5, kind: output, shape index: {}]
  %s6 = sld [smem:[#allocation0]]
  $region34: #{mlp_forward.1} parent=0
    _
  %s8 = ssub.s32 1, %s6
  %s9 = scalar_select 0, %s8, %s6
  $region1: #{mlp_forward.1} parent=0
    #allocation2 [shape = 'u8[262144]{0}', space=vmem, size = 0x40000, scoped, tag = 'input window, operand 1, single buffered']
    #allocation3 [shape = 's32[1]{0}', space=sflag, size = 0x4, scoped, tag = 'scoped memory for mlp_forward.1']
    %10 = vsyncpa [#allocation3], 0
    // Predicated region
    $region2: #{mlp_forward.1} parent=1 // pred_check
      _
    $region3: #{mlp_forward.1} parent=1 // pred_check_branch
      %12 = sbr.rel (0) target = $region5
    $region4: #{mlp_forward.1} parent=1 // pred_region
      _
    $region5: #{mlp_forward.1} parent=1 // pred_fallthru
      _
    // Predicated region
    $region6: #{mlp_forward.1} parent=1 // pred_check
      _
    $region7: #{mlp_forward.1} parent=1 // pred_check_branch
      %14 = sbr.rel (0) target = $region9
    $region8: #{mlp_forward.1} parent=1 // pred_region
      %s16 = ssub.s32 8192, 8192
      %17 = vsyncadd [#allocation3], %s16
      %s18 = sshll.u32 [#allocation2], 4
      %s19 = int_to_ptr.vmem [resolvable:$true] %s18
      %24 = dma.hbm_to_vmem [thread:$0]  %s1, 8192, %s19, [#allocation3], 64, 64, 4
    $region9: #{mlp_forward.1} parent=1 // pred_fallthru
      _
    // Predicated region
    $region10: #{mlp_forward.1} parent=1 // pred_check
      _
    $region11: #{mlp_forward.1} parent=1 // pred_check_branch
      %26 = sbr.rel (0) target = $region13
    $region12: #{mlp_forward.1} parent=1 // pred_region
      _
    $region13: #{mlp_forward.1} parent=1 // pred_fallthru
      _
    // Predicated region
    $region14: #{mlp_forward.1} parent=1 // pred_check
      _
    $region15: #{mlp_forward.1} parent=1 // pred_check_branch
      %28 = sbr.rel (0) target = $region17
    $region16: #{mlp_forward.1} parent=1 // pred_region
      _
    $region17: #{mlp_forward.1} parent=1 // pred_fallthru
      _
    // Predicated region
    $region18: #{mlp_forward.1} parent=1 // pred_check
      _
    $region19: #{mlp_forward.1} parent=1 // pred_check_branch
      %30 = sbr.rel (0) target = $region21
    $region20: #{mlp_forward.1} parent=1 // pred_region
      _
    $region21: #{mlp_forward.1} parent=1 // pred_fallthru
      _
    // Predicated region
    $region22: #{mlp_forward.1} parent=1 // pred_check
      _
    $region23: #{mlp_forward.1} parent=1 // pred_check_branch
      %32 = sbr.rel (0) target = $region25
    $region24: #{mlp_forward.1} parent=1 // pred_region
      %33 = dma.done [#allocation3], 8192
    $region25: #{mlp_forward.1} parent=1 // pred_fallthru
      _
    %v35 = vld [vmem:[%s0] sm:$0xff]
    %v36 = vld [vmem:[%s0 + $0x8] sm:$0xff]
    %v37 = vld [vmem:[%s0 + $0x10] sm:$0xff]
    %v38 = vld [vmem:[%s0 + $0x18] sm:$0xff]
    %v39 = vld [vmem:[%s0 + $0x20] sm:$0xff]
    %v40 = vld [vmem:[%s0 + $0x28] sm:$0xff]
    %v41 = vld [vmem:[%s0 + $0x30] sm:$0xff]
    %v42 = vld [vmem:[%s0 + $0x38] sm:$0xff]
    %v43 = vld [vmem:[#allocation2] sm:$0xf]
    %v44 = vld [vmem:[#allocation2 + $0x4] sm:$0xf]
    %v45 = vld [vmem:[#allocation2 + $0x8] sm:$0xf]
    %v46 = vld [vmem:[#allocation2 + $0xc] sm:$0xf]
    %v47 = vld [vmem:[#allocation2 + $0x10] sm:$0xf]
    %v48 = vld [vmem:[#allocation2 + $0x14] sm:$0xf]
    %v49 = vld [vmem:[#allocation2 + $0x18] sm:$0xf]
    %v50 = vld [vmem:[#allocation2 + $0x1c] sm:$0xf]
    %v51 = vld [vmem:[#allocation2 + $0x20] sm:$0xf]
    %v52 = vld [vmem:[#allocation2 + $0x24] sm:$0xf]
    %v53 = vld [vmem:[#allocation2 + $0x28] sm:$0xf]
    %v54 = vld [vmem:[#allocation2 + $0x2c] sm:$0xf]
    %v55 = vld [vmem:[#allocation2 + $0x30] sm:$0xf]
    %v56 = vld [vmem:[#allocation2 + $0x34] sm:$0xf]
    %v57 = vld [vmem:[#allocation2 + $0x38] sm:$0xf]
    %v58 = vld [vmem:[#allocation2 + $0x3c] sm:$0xf]
    %v59 = vld [vmem:[#allocation2 + $0x40] sm:$0xf]
    %v60 = vld [vmem:[#allocation2 + $0x44] sm:$0xf]
    %v61 = vld [vmem:[#allocation2 + $0x48] sm:$0xf]
    %v62 = vld [vmem:[#allocation2 + $0x4c] sm:$0xf]
    %v63 = vld [vmem:[#allocation2 + $0x50] sm:$0xf]
    %v64 = vld [vmem:[#allocation2 + $0x54] sm:$0xf]
    %v65 = vld [vmem:[#allocation2 + $0x58] sm:$0xf]
    %v66 = vld [vmem:[#allocation2 + $0x5c] sm:$0xf]
    %v67 = vld [vmem:[#allocation2 + $0x60] sm:$0xf]
    %v68 = vld [vmem:[#allocation2 + $0x64] sm:$0xf]
    %v69 = vld [vmem:[#allocation2 + $0x68] sm:$0xf]
    %v70 = vld [vmem:[#allocation2 + $0x6c] sm:$0xf]
    %v71 = vld [vmem:[#allocation2 + $0x70] sm:$0xf]
    %v72 = vld [vmem:[#allocation2 + $0x74] sm:$0xf]
    %v73 = vld [vmem:[#allocation2 + $0x78] sm:$0xf]
    %v74 = vld [vmem:[#allocation2 + $0x7c] sm:$0xf]
    %v75 = vld [vmem:[#allocation2 + $0x80] sm:$0xf]
    %v76 = vld [vmem:[#allocation2 + $0x84] sm:$0xf]
    %v77 = vld [vmem:[#allocation2 + $0x88] sm:$0xf]
    %v78 = vld [vmem:[#allocation2 + $0x8c] sm:$0xf]
    %v79 = vld [vmem:[#allocation2 + $0x90] sm:$0xf]
    %v80 = vld [vmem:[#allocation2 + $0x94] sm:$0xf]
    %v81 = vld [vmem:[#allocation2 + $0x98] sm:$0xf]
    %v82 = vld [vmem:[#allocation2 + $0x9c] sm:$0xf]
    %v83 = vld [vmem:[#allocation2 + $0xa0] sm:$0xf]
    %v84 = vld [vmem:[#allocation2 + $0xa4] sm:$0xf]
    %v85 = vld [vmem:[#allocation2 + $0xa8] sm:$0xf]
    %v86 = vld [vmem:[#allocation2 + $0xac] sm:$0xf]
    %v87 = vld [vmem:[#allocation2 + $0xb0] sm:$0xf]
    %v88 = vld [vmem:[#allocation2 + $0xb4] sm:$0xf]
    %v89 = vld [vmem:[#allocation2 + $0xb8] sm:$0xf]
    %v90 = vld [vmem:[#allocation2 + $0xbc] sm:$0xf]
    %v91 = vld [vmem:[#allocation2 + $0xc0] sm:$0xf]
    %v92 = vld [vmem:[#allocation2 + $0xc4] sm:$0xf]
    %v93 = vld [vmem:[#allocation2 + $0xc8] sm:$0xf]
    %v94 = vld [vmem:[#allocation2 + $0xcc] sm:$0xf]
    %v95 = vld [vmem:[#allocation2 + $0xd0] sm:$0xf]
    %v96 = vld [vmem:[#allocation2 + $0xd4] sm:$0xf]
    %v97 = vld [vmem:[#allocation2 + $0xd8] sm:$0xf]
    %v98 = vld [vmem:[#allocation2 + $0xdc] sm:$0xf]
    %v99 = vld [vmem:[#allocation2 + $0xe0] sm:$0xf]
    %v100 = vld [vmem:[#allocation2 + $0xe4] sm:$0xf]
    %v101 = vld [vmem:[#allocation2 + $0xe8] sm:$0xf]
    %v102 = vld [vmem:[#allocation2 + $0xec] sm:$0xf]
    %v103 = vld [vmem:[#allocation2 + $0xf0] sm:$0xf]
    %v104 = vld [vmem:[#allocation2 + $0xf4] sm:$0xf]
    %v105 = vld [vmem:[#allocation2 + $0xf8] sm:$0xf]
    %v106 = vld [vmem:[#allocation2 + $0xfc] sm:$0xf]
    %v107 = vld [vmem:[#allocation2 + $0x100] sm:$0xf]
    %v108 = vld [vmem:[#allocation2 + $0x104] sm:$0xf]
    %v109 = vld [vmem:[#allocation2 + $0x108] sm:$0xf]
    %v110 = vld [vmem:[#allocation2 + $0x10c] sm:$0xf]
    %v111 = vld [vmem:[#allocation2 + $0x110] sm:$0xf]
    %v112 = vld [vmem:[#allocation2 + $0x114] sm:$0xf]
    %v113 = vld [vmem:[#allocation2 + $0x118] sm:$0xf]
    %v114 = vld [vmem:[#allocation2 + $0x11c] sm:$0xf]
    %v115 = vld [vmem:[#allocation2 + $0x120] sm:$0xf]
    %v116 = vld [vmem:[#allocation2 + $0x124] sm:$0xf]
    %v117 = vld [vmem:[#allocation2 + $0x128] sm:$0xf]
    %v118 = vld [vmem:[#allocation2 + $0x12c] sm:$0xf]
    %v119 = vld [vmem:[#allocation2 + $0x130] sm:$0xf]
    %v120 = vld [vmem:[#allocation2 + $0x134] sm:$0xf]
    %v121 = vld [vmem:[#allocation2 + $0x138] sm:$0xf]
    %v122 = vld [vmem:[#allocation2 + $0x13c] sm:$0xf]
    %v123 = vld [vmem:[#allocation2 + $0x140] sm:$0xf]
    %v124 = vld [vmem:[#allocation2 + $0x144] sm:$0xf]
    %v125 = vld [vmem:[#allocation2 + $0x148] sm:$0xf]
    %v126 = vld [vmem:[#allocation2 + $0x14c] sm:$0xf]
    %v127 = vld [vmem:[#allocation2 + $0x150] sm:$0xf]
    %v128 = vld [vmem:[#allocation2 + $0x154] sm:$0xf]
    %v129 = vld [vmem:[#allocation2 + $0x158] sm:$0xf]
    %v130 = vld [vmem:[#allocation2 + $0x15c] sm:$0xf]
    %v131 = vld [vmem:[#allocation2 + $0x160] sm:$0xf]
    %v132 = vld [vmem:[#allocation2 + $0x164] sm:$0xf]
    %v133 = vld [vmem:[#allocation2 + $0x168] sm:$0xf]
    %v134 = vld [vmem:[#allocation2 + $0x16c] sm:$0xf]
    %v135 = vld [vmem:[#allocation2 + $0x170] sm:$0xf]
    %v136 = vld [vmem:[#allocation2 + $0x174] sm:$0xf]
    %v137 = vld [vmem:[#allocation2 + $0x178] sm:$0xf]
    %v138 = vld [vmem:[#allocation2 + $0x17c] sm:$0xf]
    %v139 = vld [vmem:[#allocation2 + $0x180] sm:$0xf]
    %v140 = vld [vmem:[#allocation2 + $0x184] sm:$0xf]
    %v141 = vld [vmem:[#allocation2 + $0x188] sm:$0xf]
    %v142 = vld [vmem:[#allocation2 + $0x18c] sm:$0xf]
    %v143 = vld [vmem:[#allocation2 + $0x190] sm:$0xf]
    %v144 = vld [vmem:[#allocation2 + $0x194] sm:$0xf]
    %v145 = vld [vmem:[#allocation2 + $0x198] sm:$0xf]
    %v146 = vld [vmem:[#allocation2 + $0x19c] sm:$0xf]
    %v147 = vld [vmem:[#allocation2 + $0x1a0] sm:$0xf]
    %v148 = vld [vmem:[#allocation2 + $0x1a4] sm:$0xf]
    %v149 = vld [vmem:[#allocation2 + $0x1a8] sm:$0xf]
    %v150 = vld [vmem:[#allocation2 + $0x1ac] sm:$0xf]
    %v151 = vld [vmem:[#allocation2 + $0x1b0] sm:$0xf]
    %v152 = vld [vmem:[#allocation2 + $0x1b4] sm:$0xf]
    %v153 = vld [vmem:[#allocation2 + $0x1b8] sm:$0xf]
    %v154 = vld [vmem:[#allocation2 + $0x1bc] sm:$0xf]
    %v155 = vld [vmem:[#allocation2 + $0x1c0] sm:$0xf]
    %v156 = vld [vmem:[#allocation2 + $0x1c4] sm:$0xf]
    %v157 = vld [vmem:[#allocation2 + $0x1c8] sm:$0xf]
    %v158 = vld [vmem:[#allocation2 + $0x1cc] sm:$0xf]
    %v159 = vld [vmem:[#allocation2 + $0x1d0] sm:$0xf]
    %v160 = vld [vmem:[#allocation2 + $0x1d4] sm:$0xf]
    %v161 = vld [vmem:[#allocation2 + $0x1d8] sm:$0xf]
    %v162 = vld [vmem:[#allocation2 + $0x1dc] sm:$0xf]
    %v163 = vld [vmem:[#allocation2 + $0x1e0] sm:$0xf]
    %v164 = vld [vmem:[#allocation2 + $0x1e4] sm:$0xf]
    %v165 = vld [vmem:[#allocation2 + $0x1e8] sm:$0xf]
    %v166 = vld [vmem:[#allocation2 + $0x1ec] sm:$0xf]
    %v167 = vld [vmem:[#allocation2 + $0x1f0] sm:$0xf]
    %v168 = vld [vmem:[#allocation2 + $0x1f4] sm:$0xf]
    %v169 = vld [vmem:[#allocation2 + $0x1f8] sm:$0xf]
    %v170 = vld [vmem:[#allocation2 + $0x1fc] sm:$0xf]
    %v171 = vld [vmem:[%s2] sm:$0x1]
    %v173 = vlaneseq
    %v174 = vshrl.u32 %v173, 7
    %v175 = vsub.s32 0, %v174
    %v176 = vrot.slane %v171, %v175
    %v186 = vunpack.c.l.b16 %v35
    %v187 = vunpack.c.h.b16 %v35
    %v188 = vunpack.c.l.b16 %v36
    %v189 = vunpack.c.h.b16 %v36
    %v190 = vunpack.c.l.b16 %v37
    %v191 = vunpack.c.h.b16 %v37
    %v192 = vunpack.c.l.b16 %v38
    %v193 = vunpack.c.h.b16 %v38
    %v194 = vunpack.c.l.b16 %v39
    %v195 = vunpack.c.h.b16 %v39
    %v196 = vunpack.c.l.b16 %v40
    %v197 = vunpack.c.h.b16 %v40
    %v198 = vunpack.c.l.b16 %v41
    %v199 = vunpack.c.h.b16 %v41
    %v200 = vunpack.c.l.b16 %v42
    %v201 = vunpack.c.h.b16 %v42
    %v202 = vpack.c.b16 %v194, %v186
    %v203 = vpack.c.b16 %v195, %v187
    %v204 = vpack.c.b16 %v196, %v188
    %v205 = vpack.c.b16 %v197, %v189
    %v206 = vpack.c.b16 %v198, %v190
    %v207 = vpack.c.b16 %v199, %v191
    %v208 = vpack.c.b16 %v200, %v192
    %v209 = vpack.c.b16 %v201, %v193
    %v346 = vunpack.c.l.b16 %v43
    %v347 = vunpack.c.l.b16 %v44
    %v348 = vunpack.c.l.b16 %v45
    %v349 = vunpack.c.l.b16 %v46
    %v350 = vunpack.c.l.b16 %v47
    %v351 = vunpack.c.l.b16 %v48
    %v352 = vunpack.c.l.b16 %v49
    %v353 = vunpack.c.l.b16 %v50
    %v354 = vunpack.c.l.b16 %v51
    %v355 = vunpack.c.l.b16 %v52
    %v356 = vunpack.c.l.b16 %v53
    %v357 = vunpack.c.l.b16 %v54
    %v358 = vunpack.c.l.b16 %v55
    %v359 = vunpack.c.l.b16 %v56
    %v360 = vunpack.c.l.b16 %v57
    %v361 = vunpack.c.l.b16 %v58
    %v362 = vunpack.c.l.b16 %v59
    %v363 = vunpack.c.l.b16 %v60
    %v364 = vunpack.c.l.b16 %v61
    %v365 = vunpack.c.l.b16 %v62
    %v366 = vunpack.c.l.b16 %v63
    %v367 = vunpack.c.l.b16 %v64
    %v368 = vunpack.c.l.b16 %v65
    %v369 = vunpack.c.l.b16 %v66
    %v370 = vunpack.c.l.b16 %v67
    %v371 = vunpack.c.l.b16 %v68
    %v372 = vunpack.c.l.b16 %v69
    %v373 = vunpack.c.l.b16 %v70
    %v374 = vunpack.c.l.b16 %v71
    %v375 = vunpack.c.l.b16 %v72
    %v376 = vunpack.c.l.b16 %v73
    %v377 = vunpack.c.l.b16 %v74
    %v378 = vunpack.c.l.b16 %v75
    %v379 = vunpack.c.l.b16 %v76
    %v380 = vunpack.c.l.b16 %v77
    %v381 = vunpack.c.l.b16 %v78
    %v382 = vunpack.c.l.b16 %v79
    %v383 = vunpack.c.l.b16 %v80
    %v384 = vunpack.c.l.b16 %v81
    %v385 = vunpack.c.l.b16 %v82
    %v386 = vunpack.c.l.b16 %v83
    %v387 = vunpack.c.l.b16 %v84
    %v388 = vunpack.c.l.b16 %v85
    %v389 = vunpack.c.l.b16 %v86
    %v390 = vunpack.c.l.b16 %v87
    %v391 = vunpack.c.l.b16 %v88
    %v392 = vunpack.c.l.b16 %v89
    %v393 = vunpack.c.l.b16 %v90
    %v394 = vunpack.c.l.b16 %v91
    %v395 = vunpack.c.l.b16 %v92
    %v396 = vunpack.c.l.b16 %v93
    %v397 = vunpack.c.l.b16 %v94
    %v398 = vunpack.c.l.b16 %v95
    %v399 = vunpack.c.l.b16 %v96
    %v400 = vunpack.c.l.b16 %v97
    %v401 = vunpack.c.l.b16 %v98
    %v402 = vunpack.c.l.b16 %v99
    %v403 = vunpack.c.l.b16 %v100
    %v404 = vunpack.c.l.b16 %v101
    %v405 = vunpack.c.l.b16 %v102
    %v406 = vunpack.c.l.b16 %v103
    %v407 = vunpack.c.l.b16 %v104
    %v408 = vunpack.c.l.b16 %v105
    %v409 = vunpack.c.l.b16 %v106
    %v410 = vunpack.c.l.b16 %v107
    %v411 = vunpack.c.l.b16 %v108
    %v412 = vunpack.c.l.b16 %v109
    %v413 = vunpack.c.l.b16 %v110
    %v414 = vunpack.c.l.b16 %v111
    %v415 = vunpack.c.l.b16 %v112
    %v416 = vunpack.c.l.b16 %v113
    %v417 = vunpack.c.l.b16 %v114
    %v418 = vunpack.c.l.b16 %v115
    %v419 = vunpack.c.l.b16 %v116
    %v420 = vunpack.c.l.b16 %v117
    %v421 = vunpack.c.l.b16 %v118
    %v422 = vunpack.c.l.b16 %v119
    %v423 = vunpack.c.l.b16 %v120
    %v424 = vunpack.c.l.b16 %v121
    %v425 = vunpack.c.l.b16 %v122
    %v426 = vunpack.c.l.b16 %v123
    %v427 = vunpack.c.l.b16 %v124
    %v428 = vunpack.c.l.b16 %v125
    %v429 = vunpack.c.l.b16 %v126
    %v430 = vunpack.c.l.b16 %v127
    %v431 = vunpack.c.l.b16 %v128
    %v432 = vunpack.c.l.b16 %v129
    %v433 = vunpack.c.l.b16 %v130
    %v434 = vunpack.c.l.b16 %v131
    %v435 = vunpack.c.l.b16 %v132
    %v436 = vunpack.c.l.b16 %v133
    %v437 = vunpack.c.l.b16 %v134
    %v438 = vunpack.c.l.b16 %v135
    %v439 = vunpack.c.l.b16 %v136
    %v440 = vunpack.c.l.b16 %v137
    %v441 = vunpack.c.l.b16 %v138
    %v442 = vunpack.c.l.b16 %v139
    %v443 = vunpack.c.l.b16 %v140
    %v444 = vunpack.c.l.b16 %v141
    %v445 = vunpack.c.l.b16 %v142
    %v446 = vunpack.c.l.b16 %v143
    %v447 = vunpack.c.l.b16 %v144
    %v448 = vunpack.c.l.b16 %v145
    %v449 = vunpack.c.l.b16 %v146
    %v450 = vunpack.c.l.b16 %v147
    %v451 = vunpack.c.l.b16 %v148
    %v452 = vunpack.c.l.b16 %v149
    %v453 = vunpack.c.l.b16 %v150
    %v454 = vunpack.c.l.b16 %v151
    %v455 = vunpack.c.l.b16 %v152
    %v456 = vunpack.c.l.b16 %v153
    %v457 = vunpack.c.l.b16 %v154
    %v458 = vunpack.c.l.b16 %v155
    %v459 = vunpack.c.l.b16 %v156
    %v460 = vunpack.c.l.b16 %v157
    %v461 = vunpack.c.l.b16 %v158
    %v462 = vunpack.c.l.b16 %v159
    %v463 = vunpack.c.l.b16 %v160
    %v464 = vunpack.c.l.b16 %v161
    %v465 = vunpack.c.l.b16 %v162
    %v466 = vunpack.c.l.b16 %v163
    %v467 = vunpack.c.l.b16 %v164
    %v468 = vunpack.c.l.b16 %v165
    %v469 = vunpack.c.l.b16 %v166
    %v470 = vunpack.c.l.b16 %v167
    %v471 = vunpack.c.l.b16 %v168
    %v472 = vunpack.c.l.b16 %v169
    %v473 = vunpack.c.l.b16 %v170
    %v474 = vpack.c.b16 %v347, %v346
    %v475 = vpack.c.b16 %v349, %v348
    %v476 = vpack.c.b16 %v351, %v350
    %v477 = vpack.c.b16 %v353, %v352
    %v478 = vpack.c.b16 %v355, %v354
    %v479 = vpack.c.b16 %v357, %v356
    %v480 = vpack.c.b16 %v359, %v358
    %v481 = vpack.c.b16 %v361, %v360
    %v482 = vpack.c.b16 %v363, %v362
    %v483 = vpack.c.b16 %v365, %v364
    %v484 = vpack.c.b16 %v367, %v366
    %v485 = vpack.c.b16 %v369, %v368
    %v486 = vpack.c.b16 %v371, %v370
    %v487 = vpack.c.b16 %v373, %v372
    %v488 = vpack.c.b16 %v375, %v374
    %v489 = vpack.c.b16 %v377, %v376
    %v490 = vpack.c.b16 %v379, %v378
    %v491 = vpack.c.b16 %v381, %v380
    %v492 = vpack.c.b16 %v383, %v382
    %v493 = vpack.c.b16 %v385, %v384
    %v494 = vpack.c.b16 %v387, %v386
    %v495 = vpack.c.b16 %v389, %v388
    %v496 = vpack.c.b16 %v391, %v390
    %v497 = vpack.c.b16 %v393, %v392
    %v498 = vpack.c.b16 %v395, %v394
    %v499 = vpack.c.b16 %v397, %v396
    %v500 = vpack.c.b16 %v399, %v398
    %v501 = vpack.c.b16 %v401, %v400
    %v502 = vpack.c.b16 %v403, %v402
    %v503 = vpack.c.b16 %v405, %v404
    %v504 = vpack.c.b16 %v407, %v406
    %v505 = vpack.c.b16 %v409, %v408
    %v506 = vpack.c.b16 %v411, %v410
    %v507 = vpack.c.b16 %v413, %v412
    %v508 = vpack.c.b16 %v415, %v414
    %v509 = vpack.c.b16 %v417, %v416
    %v510 = vpack.c.b16 %v419, %v418
    %v511 = vpack.c.b16 %v421, %v420
    %v512 = vpack.c.b16 %v423, %v422
    %v513 = vpack.c.b16 %v425, %v424
    %v514 = vpack.c.b16 %v427, %v426
    %v515 = vpack.c.b16 %v429, %v428
    %v516 = vpack.c.b16 %v431, %v430
    %v517 = vpack.c.b16 %v433, %v432
    %v518 = vpack.c.b16 %v435, %v434
    %v519 = vpack.c.b16 %v437, %v436
    %v520 = vpack.c.b16 %v439, %v438
    %v521 = vpack.c.b16 %v441, %v440
    %v522 = vpack.c.b16 %v443, %v442
    %v523 = vpack.c.b16 %v445, %v444
    %v524 = vpack.c.b16 %v447, %v446
    %v525 = vpack.c.b16 %v449, %v448
    %v526 = vpack.c.b16 %v451, %v450
    %v527 = vpack.c.b16 %v453, %v452
    %v528 = vpack.c.b16 %v455, %v454
    %v529 = vpack.c.b16 %v457, %v456
    %v530 = vpack.c.b16 %v459, %v458
    %v531 = vpack.c.b16 %v461, %v460
    %v532 = vpack.c.b16 %v463, %v462
    %v533 = vpack.c.b16 %v465, %v464
    %v534 = vpack.c.b16 %v467, %v466
    %v535 = vpack.c.b16 %v469, %v468
    %v536 = vpack.c.b16 %v471, %v470
    %v537 = vpack.c.b16 %v473, %v472
    %602 = vmatprep.subr.bf16.mxu0 0
    %603 = vmatpush1.bf16.msra.mxu0 %v474
    %604 = vmatprep.subr.bf16.mxu0 0
    %605 = vmatpush1.bf16.msra.mxu0 %v475
    %606 = vmatprep.subr.bf16.mxu0 0
    %607 = vmatpush1.bf16.msra.mxu0 %v476
    %608 = vmatprep.subr.bf16.mxu0 0
    %609 = vmatpush1.bf16.msra.mxu0 %v477
    %610 = vmatprep.subr.bf16.mxu0 0
    %611 = vmatpush1.bf16.msra.mxu0 %v478
    %612 = vmatprep.subr.bf16.mxu0 0
    %613 = vmatpush1.bf16.msra.mxu0 %v479
    %614 = vmatprep.subr.bf16.mxu0 0
    %615 = vmatpush1.bf16.msra.mxu0 %v480
    %616 = vmatprep.subr.bf16.mxu0 0
    %617 = vmatpush1.bf16.msra.mxu0 %v481
    %618 = vmatprep.subr.bf16.mxu0 0
    %619 = vmatpush1.bf16.msra.mxu0 %v482
    %620 = vmatprep.subr.bf16.mxu0 0
    %621 = vmatpush1.bf16.msra.mxu0 %v483
    %622 = vmatprep.subr.bf16.mxu0 0
    %623 = vmatpush1.bf16.msra.mxu0 %v484
    %624 = vmatprep.subr.bf16.mxu0 0
    %625 = vmatpush1.bf16.msra.mxu0 %v485
    %626 = vmatprep.subr.bf16.mxu0 0
    %627 = vmatpush1.bf16.msra.mxu0 %v486
    %628 = vmatprep.subr.bf16.mxu0 0
    %629 = vmatpush1.bf16.msra.mxu0 %v487
    %630 = vmatprep.subr.bf16.mxu0 0
    %631 = vmatpush1.bf16.msra.mxu0 %v488
    %632 = vmatprep.subr.bf16.mxu0 0
    %633 = vmatpush1.bf16.msra.mxu0 %v489
    %634 = vmatprep.mubr.bf16.mxu0 %v203
    %635 = vmatmul.mubr.bf16.gmra.mrb[0].mxu0 %v202
    %v636 = vpop.f32.mrb[0].mxu0
    %v637 = vadd.f32 %v176, %v636
    %v638 = vpop.f32.mrb[0].mxu0
    %v639 = vpop.f32.mrb[0].mxu0
    %v640 = vadd.f32 %v176, %v639
    %v641 = vpop.f32.mrb[0].mxu0
    %642 = vdwg.mxu0
    %643 = vmatprep.subr.bf16.mxu0 0
    %644 = vmatpush1.bf16.msra.mxu0 %v490
    %645 = vmatprep.subr.bf16.mxu0 0
    %646 = vmatpush1.bf16.msra.mxu0 %v491
    %647 = vmatprep.subr.bf16.mxu0 0
    %648 = vmatpush1.bf16.msra.mxu0 %v492
    %649 = vmatprep.subr.bf16.mxu0 0
    %650 = vmatpush1.bf16.msra.mxu0 %v493
    %651 = vmatprep.subr.bf16.mxu0 0
    %652 = vmatpush1.bf16.msra.mxu0 %v494
    %653 = vmatprep.subr.bf16.mxu0 0
    %654 = vmatpush1.bf16.msra.mxu0 %v495
    %655 = vmatprep.subr.bf16.mxu0 0
    %656 = vmatpush1.bf16.msra.mxu0 %v496
    %657 = vmatprep.subr.bf16.mxu0 0
    %658 = vmatpush1.bf16.msra.mxu0 %v497
    %659 = vmatprep.subr.bf16.mxu0 0
    %660 = vmatpush1.bf16.msra.mxu0 %v498
    %661 = vmatprep.subr.bf16.mxu0 0
    %662 = vmatpush1.bf16.msra.mxu0 %v499
    %663 = vmatprep.subr.bf16.mxu0 0
    %664 = vmatpush1.bf16.msra.mxu0 %v500
    %665 = vmatprep.subr.bf16.mxu0 0
    %666 = vmatpush1.bf16.msra.mxu0 %v501
    %667 = vmatprep.subr.bf16.mxu0 0
    %668 = vmatpush1.bf16.msra.mxu0 %v502
    %669 = vmatprep.subr.bf16.mxu0 0
    %670 = vmatpush1.bf16.msra.mxu0 %v503
    %671 = vmatprep.subr.bf16.mxu0 0
    %672 = vmatpush1.bf16.msra.mxu0 %v504
    %673 = vmatprep.subr.bf16.mxu0 0
    %674 = vmatpush1.bf16.msra.mxu0 %v505
    %675 = vmatprep.mubr.bf16.mxu0 %v205
    %676 = vmatmul.mubr.bf16.gmra.mrb[0].mxu0 %v204
    %v677 = vpop.f32.mrb[0].mxu0
    %v678 = vadd.f32 %v637, %v677
    %v679 = vpop.f32.mrb[0].mxu0
    %v680 = vpop.f32.mrb[0].mxu0
    %v681 = vadd.f32 %v640, %v680
    %v682 = vpop.f32.mrb[0].mxu0
    %683 = vdwg.mxu0
    %684 = vmatprep.subr.bf16.mxu0 0
    %685 = vmatpush1.bf16.msra.mxu0 %v506
    %686 = vmatprep.subr.bf16.mxu0 0
    %687 = vmatpush1.bf16.msra.mxu0 %v507
    %688 = vmatprep.subr.bf16.mxu0 0
    %689 = vmatpush1.bf16.msra.mxu0 %v508
    %690 = vmatprep.subr.bf16.mxu0 0
    %691 = vmatpush1.bf16.msra.mxu0 %v509
    %692 = vmatprep.subr.bf16.mxu0 0
    %693 = vmatpush1.bf16.msra.mxu0 %v510
    %694 = vmatprep.subr.bf16.mxu0 0
    %695 = vmatpush1.bf16.msra.mxu0 %v511
    %696 = vmatprep.subr.bf16.mxu0 0
    %697 = vmatpush1.bf16.msra.mxu0 %v512
    %698 = vmatprep.subr.bf16.mxu0 0
    %699 = vmatpush1.bf16.msra.mxu0 %v513
    %700 = vmatprep.subr.bf16.mxu0 0
    %701 = vmatpush1.bf16.msra.mxu0 %v514
    %702 = vmatprep.subr.bf16.mxu0 0
    %703 = vmatpush1.bf16.msra.mxu0 %v515
    %704 = vmatprep.subr.bf16.mxu0 0
    %705 = vmatpush1.bf16.msra.mxu0 %v516
    %706 = vmatprep.subr.bf16.mxu0 0
    %707 = vmatpush1.bf16.msra.mxu0 %v517
    %708 = vmatprep.subr.bf16.mxu0 0
    %709 = vmatpush1.bf16.msra.mxu0 %v518
    %710 = vmatprep.subr.bf16.mxu0 0
    %711 = vmatpush1.bf16.msra.mxu0 %v519
    %712 = vmatprep.subr.bf16.mxu0 0
    %713 = vmatpush1.bf16.msra.mxu0 %v520
    %714 = vmatprep.subr.bf16.mxu0 0
    %715 = vmatpush1.bf16.msra.mxu0 %v521
    %716 = vmatprep.mubr.bf16.mxu0 %v207
    %717 = vmatmul.mubr.bf16.gmra.mrb[0].mxu0 %v206
    %v718 = vpop.f32.mrb[0].mxu0
    %v719 = vadd.f32 %v678, %v718
    %v720 = vpop.f32.mrb[0].mxu0
    %v721 = vpop.f32.mrb[0].mxu0
    %v722 = vadd.f32 %v681, %v721
    %v723 = vpop.f32.mrb[0].mxu0
    %724 = vdwg.mxu0
    %725 = vmatprep.subr.bf16.mxu0 0
    %726 = vmatpush1.bf16.msra.mxu0 %v522
    %727 = vmatprep.subr.bf16.mxu0 0
    %728 = vmatpush1.bf16.msra.mxu0 %v523
    %729 = vmatprep.subr.bf16.mxu0 0
    %730 = vmatpush1.bf16.msra.mxu0 %v524
    %731 = vmatprep.subr.bf16.mxu0 0
    %732 = vmatpush1.bf16.msra.mxu0 %v525
    %733 = vmatprep.subr.bf16.mxu0 0
    %734 = vmatpush1.bf16.msra.mxu0 %v526
    %735 = vmatprep.subr.bf16.mxu0 0
    %736 = vmatpush1.bf16.msra.mxu0 %v527
    %737 = vmatprep.subr.bf16.mxu0 0
    %738 = vmatpush1.bf16.msra.mxu0 %v528
    %739 = vmatprep.subr.bf16.mxu0 0
    %740 = vmatpush1.bf16.msra.mxu0 %v529
    %741 = vmatprep.subr.bf16.mxu0 0
    %742 = vmatpush1.bf16.msra.mxu0 %v530
    %743 = vmatprep.subr.bf16.mxu0 0
    %744 = vmatpush1.bf16.msra.mxu0 %v531
    %745 = vmatprep.subr.bf16.mxu0 0
    %746 = vmatpush1.bf16.msra.mxu0 %v532
    %747 = vmatprep.subr.bf16.mxu0 0
    %748 = vmatpush1.bf16.msra.mxu0 %v533
    %749 = vmatprep.subr.bf16.mxu0 0
    %750 = vmatpush1.bf16.msra.mxu0 %v534
    %751 = vmatprep.subr.bf16.mxu0 0
    %752 = vmatpush1.bf16.msra.mxu0 %v535
    %753 = vmatprep.subr.bf16.mxu0 0
    %754 = vmatpush1.bf16.msra.mxu0 %v536
    %755 = vmatprep.subr.bf16.mxu0 0
    %756 = vmatpush1.bf16.msra.mxu0 %v537
    %757 = vmatprep.mubr.bf16.mxu0 %v209
    %758 = vmatmul.mubr.bf16.gmra.mrb[0].mxu0 %v208
    %v759 = vpop.f32.mrb[0].mxu0
    %v760 = vadd.f32 %v719, %v759
    %v761 = vpop.f32.mrb[0].mxu0
    %v762 = vpop.f32.mrb[0].mxu0
    %v763 = vadd.f32 %v722, %v762
    %v764 = vpop.f32.mrb[0].mxu0
    %765 = vdwg.mxu0
    %v766 = vmax.f32 %v760, 0.0
    %v767 = vmax.f32 %v763, 0.0
    %v768 = vpack.c.bf16 %v767, %v766
    %v769 = vld [vmem:[%s3] sm:$0xf]
    %v770 = vld [vmem:[%s3 + $0x4] sm:$0xf]
    %v771 = vld [vmem:[%s3 + $0x8] sm:$0xf]
    %v772 = vld [vmem:[%s3 + $0xc] sm:$0xf]
    %v773 = vld [vmem:[%s3 + $0x10] sm:$0xf]
    %v774 = vld [vmem:[%s3 + $0x14] sm:$0xf]
    %v775 = vld [vmem:[%s3 + $0x18] sm:$0xf]
    %v776 = vld [vmem:[%s3 + $0x1c] sm:$0xf]
    %v777 = vld [vmem:[%s3 + $0x20] sm:$0xf]
    %v778 = vld [vmem:[%s3 + $0x24] sm:$0xf]
    %v779 = vld [vmem:[%s3 + $0x28] sm:$0xf]
    %v780 = vld [vmem:[%s3 + $0x2c] sm:$0xf]
    %v781 = vld [vmem:[%s3 + $0x30] sm:$0xf]
    %v782 = vld [vmem:[%s3 + $0x34] sm:$0xf]
    %v783 = vld [vmem:[%s3 + $0x38] sm:$0xf]
    %v784 = vld [vmem:[%s3 + $0x3c] sm:$0xf]
    %v785 = vld [vmem:[%s4] sm:$0x1]
    %v787 = vlaneseq
    %v788 = vshrl.u32 %v787, 7
    %v789 = vsub.s32 0, %v788
    %v790 = vrot.slane %v785, %v789
    %v808 = vunpack.c.l.b16 %v769
    %v809 = vunpack.c.l.b16 %v770
    %v810 = vunpack.c.l.b16 %v771
    %v811 = vunpack.c.l.b16 %v772
    %v812 = vunpack.c.l.b16 %v773
    %v813 = vunpack.c.l.b16 %v774
    %v814 = vunpack.c.l.b16 %v775
    %v815 = vunpack.c.l.b16 %v776
    %v816 = vunpack.c.l.b16 %v777
    %v817 = vunpack.c.l.b16 %v778
    %v818 = vunpack.c.l.b16 %v779
    %v819 = vunpack.c.l.b16 %v780
    %v820 = vunpack.c.l.b16 %v781
    %v821 = vunpack.c.l.b16 %v782
    %v822 = vunpack.c.l.b16 %v783
    %v823 = vunpack.c.l.b16 %v784
    %v824 = vpack.c.b16 %v809, %v808
    %v825 = vpack.c.b16 %v811, %v810
    %v826 = vpack.c.b16 %v813, %v812
    %v827 = vpack.c.b16 %v815, %v814
    %v828 = vpack.c.b16 %v817, %v816
    %v829 = vpack.c.b16 %v819, %v818
    %v830 = vpack.c.b16 %v821, %v820
    %v831 = vpack.c.b16 %v823, %v822
    %840 = vmatprep.subr.bf16.mxu0 0
    %841 = vmatpush1.bf16.msra.mxu0 %v824
    %842 = vmatprep.subr.bf16.mxu0 0
    %843 = vmatpush1.bf16.msra.mxu0 %v825
    %844 = vmatprep.subr.bf16.mxu0 0
    %845 = vmatpush1.bf16.msra.mxu0 %v826
    %846 = vmatprep.subr.bf16.mxu0 0
    %847 = vmatpush1.bf16.msra.mxu0 %v827
    %848 = vmatprep.subr.bf16.mxu0 0
    %849 = vmatpush1.bf16.msra.mxu0 %v828
    %850 = vmatprep.subr.bf16.mxu0 0
    %851 = vmatpush1.bf16.msra.mxu0 %v829
    %852 = vmatprep.subr.bf16.mxu0 0
    %853 = vmatpush1.bf16.msra.mxu0 %v830
    %854 = vmatprep.subr.bf16.mxu0 0
    %855 = vmatpush1.bf16.msra.mxu0 %v831
    %856 = vmatprep.subr.bf16.mxu0 0
    %857 = vmatpush1.bf16.msra.mxu0 0
    %858 = vmatprep.subr.bf16.mxu0 0
    %859 = vmatpush1.bf16.msra.mxu0 0
    %860 = vmatprep.subr.bf16.mxu0 0
    %861 = vmatpush1.bf16.msra.mxu0 0
    %862 = vmatprep.subr.bf16.mxu0 0
    %863 = vmatpush1.bf16.msra.mxu0 0
    %864 = vmatprep.subr.bf16.mxu0 0
    %865 = vmatpush1.bf16.msra.mxu0 0
    %866 = vmatprep.subr.bf16.mxu0 0
    %867 = vmatpush1.bf16.msra.mxu0 0
    %868 = vmatprep.subr.bf16.mxu0 0
    %869 = vmatpush1.bf16.msra.mxu0 0
    %870 = vmatprep.subr.bf16.mxu0 0
    %871 = vmatpush1.bf16.msra.mxu0 0
    %872 = vmatprep.mubr.bf16.mxu0 0
    %873 = vmatmul.mubr.bf16.gmra.mrb[0].mxu0 %v768
    %v874 = vpop.f32.mrb[0].mxu0
    %v875 = vadd.f32 %v790, %v874
    %v876 = vpop.f32.mrb[0].mxu0
    %v877 = vpop.f32.mrb[0].mxu0
    %v878 = vadd.f32 %v790, %v877
    %v879 = vpop.f32.mrb[0].mxu0
    %880 = vdwg.mxu0
    %881 = vst [vmem:[%s5] sm:$0xff] %v875
    %882 = vst [vmem:[%s5 + $0x8] sm:$0xff] %v878
    // Predicated region
    $region26: #{mlp_forward.1} parent=1 // pred_check
      _
    $region27: #{mlp_forward.1} parent=1 // pred_check_branch
      %884 = sbr.rel (0) target = $region29
    $region28: #{mlp_forward.1} parent=1 // pred_region
      _
    $region29: #{mlp_forward.1} parent=1 // pred_fallthru
      _
    // Predicated region
    $region30: #{mlp_forward.1} parent=1 // pred_check
      _
    $region31: #{mlp_forward.1} parent=1 // pred_check_branch
      %886 = sbr.rel (0) target = $region33
    $region32: #{mlp_forward.1} parent=1 // pred_region
      _
    $region33: #{mlp_forward.1} parent=1 // pred_fallthru
      _
    %887 = vsyncpa [#allocation3], 1

</llo_original>
